<compile_context>
chip_gen: v6e
topology: v6e:2x2x1
jax: 0.10.0
libtpu: 0.0.40
codegen_flags: <defaults>
</compile_context>

<pallas_src>
import functools

import jax
import jax.numpy as jnp
from jax.experimental import pallas as pl
from jax.experimental.pallas import tpu as pltpu

LANE = 128
SUBLANE = 8


def _round_up(x, m):
    return ((x + m - 1) // m) * m


# --------------------------------------------------------------------------
# Kernel
# --------------------------------------------------------------------------
def _encoder_kernel(x_ref, w_ref, out_ref, *, S, Bp, PW):
    """x_ref: (S*Bp, PW) time-major, zero-padded.  w_ref: (PW, 10*PW) slab.

    Slab column layout (all blocks PW lanes wide, zero padded):
      [0PW,1PW)  W1      [1PW,2PW)  W2
      [2PW,5PW)  Wi gates (r|z|n, one PW block each)
      [5PW,8PW)  Wh gates (r|z|n)
      [8PW,9PW)  W3      [9PW,10PW) W4
    """
    w1 = w_ref[:, 0 * PW:1 * PW]
    w2 = w_ref[:, 1 * PW:2 * PW]
    wi = w_ref[:, 2 * PW:5 * PW]
    wh = w_ref[:, 5 * PW:8 * PW]
    w3 = w_ref[:, 8 * PW:9 * PW]
    w4 = w_ref[:, 9 * PW:10 * PW]

    # ---- embedding MLP for every (t, b) row at once ----------------------
    x = x_ref[...]                                                  # (S*Bp, PW)
    h1 = jnp.maximum(jnp.dot(x, w1, preferred_element_type=jnp.float32), 0.0)
    e = jnp.maximum(jnp.dot(h1, w2, preferred_element_type=jnp.float32), 0.0)

    # ---- fused, lane-aligned input-gate projection for all timesteps -----
    xg = jnp.dot(e, wi, preferred_element_type=jnp.float32)        # (S*Bp, 3*PW)

    # ---- GRU recurrence, t = 0 peeled (h0 == 0  =>  gh == 0) --------------
    gx0 = xg[0:Bp, :]
    u0 = jax.nn.sigmoid(gx0[:, PW:2 * PW])
    n0 = jnp.tanh(gx0[:, 2 * PW:3 * PW])
    h = (1.0 - u0) * n0                                            # (Bp, PW)

    # Statically unrolled; every slice is 8-sublane / 128-lane aligned.
    for t in range(1, S):
        gx = xg[t * Bp:(t + 1) * Bp, :]
        gh = jnp.dot(h, wh, preferred_element_type=jnp.float32)    # (Bp, 3*PW)
        r = jax.nn.sigmoid(gx[:, 0:PW] + gh[:, 0:PW])
        u = jax.nn.sigmoid(gx[:, PW:2 * PW] + gh[:, PW:2 * PW])
        n = jnp.tanh(gx[:, 2 * PW:3 * PW] + r * gh[:, 2 * PW:3 * PW])
        h = (1.0 - u) * n + u * h

    # ---- output_linear: Linear -> ReLU -> Linear --------------------------
    t1 = jnp.maximum(jnp.dot(h, w3, preferred_element_type=jnp.float32), 0.0)
    out_ref[...] = jnp.dot(t1, w4, preferred_element_type=jnp.float32)


# --------------------------------------------------------------------------
# Jitted wrapper (one dispatch: layout prep + kernel + mean/var slices)
# --------------------------------------------------------------------------
@functools.partial(jax.jit, static_argnames=("latent_dim",))
def pretext_encoder_forward(x, w_slab, *, latent_dim):
    """Returns (mean, var), each (B, latent_dim) — matches PretextEncoder.forward."""
    # Mirror the module's unsqueeze behaviour.
    if x.ndim == 1:
        x = x[None]
    if x.ndim == 2:
        x = x[None]
    B, S, D = x.shape
    PW = w_slab.shape[0]
    Bp = _round_up(max(B, SUBLANE), SUBLANE)

    # Time-major, batch padded to sublanes, features padded to lanes.
    xt = jnp.transpose(x, (1, 0, 2)).astype(jnp.float32)            # (S, B, D)
    xt = jnp.pad(xt, ((0, 0), (0, Bp - B), (0, PW - D)))
    x2d = xt.reshape(S * Bp, PW)

    kernel = functools.partial(_encoder_kernel, S=S, Bp=Bp, PW=PW)
    vmem = pl.BlockSpec(memory_space=pltpu.MemorySpace.VMEM)

    out = pl.pallas_call(
        kernel,
        out_shape=jax.ShapeDtypeStruct((Bp, PW), jnp.float32),      # lane-dense
        in_specs=[vmem, vmem],
        out_specs=vmem,
    )(x2d, w_slab)

    L = latent_dim
    return out[:B, 0:L], out[:B, L:2 * L]                           # (mean, var)


# --------------------------------------------------------------------------
# Parameter init (matches the module's orthogonal / zero-bias init) + packing
# --------------------------------------------------------------------------
def init_params(key, *, input_dim, embed_dim, latent_dim, hidden_dim):
    """Deterministic orthogonal init matching the module's __init__ (biases = 0)."""
    orth = jax.nn.initializers.orthogonal
    ks = jax.random.split(key, 6)
    g = 2.0 ** 0.5
    H = hidden_dim
    # PyTorch Linear weights are (out, in); store transposed (in, out).
    W1 = orth(scale=g)(ks[0], (32, input_dim), jnp.float32).T
    W2 = orth(scale=g)(ks[1], (embed_dim, 32), jnp.float32).T
    Wih = orth()(ks[2], (3 * H, embed_dim), jnp.float32)    # weight_ih_l0, [r|z|n]
    Whh = orth()(ks[3], (3 * H, H), jnp.float32)            # weight_hh_l0
    W3 = orth(scale=g)(ks[4], (H, H), jnp.float32).T
    W4 = orth(scale=g)(ks[5], (2 * latent_dim, H), jnp.float32).T
    return dict(W1=W1, W2=W2, Wi=Wih.T, Wh=Whh.T, W3=W3, W4=W4)


def pack_params(p):
    """Pack all weights into one lane-padded (PW, 10*PW) f32 slab (done once)."""
    W1, W2, Wi, Wh, W3, W4 = p["W1"], p["W2"], p["Wi"], p["Wh"], p["W3"], p["W4"]
    input_dim = W1.shape[0]
    embed_dim = W2.shape[1]
    H = Wh.shape[0]
    out_dim = W4.shape[1]
    PW = _round_up(max(input_dim, 32, embed_dim, H, out_dim), LANE)

    slab = jnp.zeros((PW, 10 * PW), jnp.float32)

    def put(s, mat, col0):
        r, c = mat.shape
        return s.at[0:r, col0:col0 + c].set(mat.astype(jnp.float32))

    slab = put(slab, W1, 0 * PW)
    slab = put(slab, W2, 1 * PW)
    for g in range(3):                       # lane-align each GRU gate block
        slab = put(slab, Wi[:, g * H:(g + 1) * H], (2 + g) * PW)
        slab = put(slab, Wh[:, g * H:(g + 1) * H], (5 + g) * PW)
    slab = put(slab, W3, 8 * PW)
    slab = put(slab, W4, 9 * PW)
    return slab


# --------------------------------------------------------------------------
# Pure-JAX reference (mirrors the PyTorch module with zero biases)
# --------------------------------------------------------------------------
def reference_forward(x, p):
    W1, W2, Wi, Wh, W3, W4 = p["W1"], p["W2"], p["Wi"], p["Wh"], p["W3"], p["W4"]
    H = Wh.shape[0]
    B, S, _ = x.shape
    h1 = jnp.maximum(x @ W1, 0.0)
    e = jnp.maximum(h1 @ W2, 0.0)                           # (B, S, embed)
    h = jnp.zeros((B, H), jnp.float32)
    for t in range(S):
        gx = e[:, t, :] @ Wi
        gh = h @ Wh
        r = jax.nn.sigmoid(gx[:, :H] + gh[:, :H])
        u = jax.nn.sigmoid(gx[:, H:2 * H] + gh[:, H:2 * H])
        n = jnp.tanh(gx[:, 2 * H:] + r * gh[:, 2 * H:])
        h = (1.0 - u) * n + u * h
    t1 = jnp.maximum(h @ W3, 0.0)
    out = t1 @ W4
    L = out.shape[1] // 2
    return out[:, :L], out[:, L:]


if __name__ == "__main__":
    # Small shapes consistent with the module's forward.
    # NOTE(perf): callers that invoke this per env-step should batch B >= 8
    # (ideally 64-256) before calling — that is the only lever that turns the
    # kernel from fixed-overhead-bound into useful MXU/VPU work.
    B, seq_len = 4, 8
    input_dim, embed_dim, latent_dim, hidden_dim = 2, 16, 2, 32

    key = jax.random.PRNGKey(0)
    kp, kx = jax.random.split(key)
    params = init_params(kp, input_dim=input_dim, embed_dim=embed_dim,
                         latent_dim=latent_dim, hidden_dim=hidden_dim)
    w_slab = jax.block_until_ready(pack_params(params))     # packed once, reused
    x = jax.random.normal(kx, (B, seq_len, input_dim), jnp.float32)

    mean, var = pretext_encoder_forward(x, w_slab, latent_dim=latent_dim)
    mean, var = jax.block_until_ready((mean, var))

    rmean, rvar = reference_forward(x, params)

    assert mean.shape == (B, latent_dim), mean.shape
    assert var.shape == (B, latent_dim), var.shape
    assert bool(jnp.all(jnp.isfinite(mean))) and bool(jnp.all(jnp.isfinite(var)))
    assert jnp.allclose(mean, rmean, atol=1e-3, rtol=1e-3), (
        float(jnp.max(jnp.abs(mean - rmean))))
    assert jnp.allclose(var, rvar, atol=1e-3, rtol=1e-3), (
        float(jnp.max(jnp.abs(var - rvar))))

    print("KERNEL_OK")
</pallas_src>

<mosaic_0001>
module attributes {stable_mosaic.version = 11 : i64} {
  func.func @_encoder_kernel(%arg0: memref<64x128xf32, #tpu.memory_space<vmem>>, %arg1: memref<128x1280xf32, #tpu.memory_space<vmem>>, %arg2: memref<8x128xf32, #tpu.memory_space<vmem>>) attributes {dimension_semantics = [], scalar_prefetch = 0 : i64, scratch_operands = 0 : i64, tpu.core_type = #tpu.core_type<tc>} {
    %c0 = arith.constant 0 : index
    %c0_0 = arith.constant 0 : index
    %0 = vector.load %arg1[%c0, %c0_0] : memref<128x1280xf32, #tpu.memory_space<vmem>>, vector<128x128xf32>
    %c0_1 = arith.constant 0 : index
    %c128 = arith.constant 128 : index
    %1 = vector.load %arg1[%c0_1, %c128] : memref<128x1280xf32, #tpu.memory_space<vmem>>, vector<128x128xf32>
    %c0_2 = arith.constant 0 : index
    %c256 = arith.constant 256 : index
    %2 = vector.load %arg1[%c0_2, %c256] : memref<128x1280xf32, #tpu.memory_space<vmem>>, vector<128x384xf32>
    %c0_3 = arith.constant 0 : index
    %c640 = arith.constant 640 : index
    %3 = vector.load %arg1[%c0_3, %c640] : memref<128x1280xf32, #tpu.memory_space<vmem>>, vector<128x384xf32>
    %c0_4 = arith.constant 0 : index
    %c1024 = arith.constant 1024 : index
    %4 = vector.load %arg1[%c0_4, %c1024] : memref<128x1280xf32, #tpu.memory_space<vmem>>, vector<128x128xf32>
    %c0_5 = arith.constant 0 : index
    %c1152 = arith.constant 1152 : index
    %5 = vector.load %arg1[%c0_5, %c1152] : memref<128x1280xf32, #tpu.memory_space<vmem>>, vector<128x128xf32>
    %c0_6 = arith.constant 0 : index
    %c0_7 = arith.constant 0 : index
    %6 = vector.load %arg0[%c0_6, %c0_7] : memref<64x128xf32, #tpu.memory_space<vmem>>, vector<64x128xf32>
    %cst = arith.constant dense<0.000000e+00> : vector<64x128xf32>
    %7 = tpu.matmul %6, %0, %cst {dimension_numbers = #tpu.dot_dimension_numbers<[1], [0], [0], [1], [0, 0, 1, 1], [], []>} : vector<64x128xf32>, vector<128x128xf32>, vector<64x128xf32> -> vector<64x128xf32>
    %cst_8 = arith.constant 0.000000e+00 : f32
    %8 = vector.broadcast %cst_8 : f32 to vector<64x128xf32>
    %9 = arith.maximumf %7, %8 : vector<64x128xf32>
    %cst_9 = arith.constant dense<0.000000e+00> : vector<64x128xf32>
    %10 = tpu.matmul %9, %1, %cst_9 {dimension_numbers = #tpu.dot_dimension_numbers<[1], [0], [0], [1], [0, 0, 1, 1], [], []>} : vector<64x128xf32>, vector<128x128xf32>, vector<64x128xf32> -> vector<64x128xf32>
    %cst_10 = arith.constant 0.000000e+00 : f32
    %11 = vector.broadcast %cst_10 : f32 to vector<64x128xf32>
    %12 = arith.maximumf %10, %11 : vector<64x128xf32>
    %cst_11 = arith.constant dense<0.000000e+00> : vector<64x384xf32>
    %13 = tpu.matmul %12, %2, %cst_11 {dimension_numbers = #tpu.dot_dimension_numbers<[1], [0], [0], [1], [0, 0, 1, 1], [], []>} : vector<64x128xf32>, vector<128x384xf32>, vector<64x384xf32> -> vector<64x384xf32>
    %14 = vector.extract_strided_slice %13 {offsets = [0, 0], sizes = [8, 384], strides = [1, 1]} : vector<64x384xf32> to vector<8x384xf32>
    %15 = vector.extract_strided_slice %14 {offsets = [0, 128], sizes = [8, 128], strides = [1, 1]} : vector<8x384xf32> to vector<8x128xf32>
    %16 = arith.negf %15 : vector<8x128xf32>
    %17 = math.exp %16 : vector<8x128xf32>
    %cst_12 = arith.constant 1.000000e+00 : f32
    %18 = vector.broadcast %cst_12 : f32 to vector<8x128xf32>
    %19 = arith.addf %18, %17 : vector<8x128xf32>
    %20 = arith.divf %18, %19 : vector<8x128xf32>
    %21 = vector.extract_strided_slice %14 {offsets = [0, 256], sizes = [8, 128], strides = [1, 1]} : vector<8x384xf32> to vector<8x128xf32>
    %22 = math.tanh %21 : vector<8x128xf32>
    %cst_13 = arith.constant 1.000000e+00 : f32
    %23 = vector.broadcast %cst_13 : f32 to vector<8x128xf32>
    %24 = arith.subf %23, %20 : vector<8x128xf32>
    %25 = arith.mulf %24, %22 : vector<8x128xf32>
    %26 = vector.extract_strided_slice %13 {offsets = [8, 0], sizes = [8, 384], strides = [1, 1]} : vector<64x384xf32> to vector<8x384xf32>
    %cst_14 = arith.constant dense<0.000000e+00> : vector<8x384xf32>
    %27 = tpu.matmul %25, %3, %cst_14 {dimension_numbers = #tpu.dot_dimension_numbers<[1], [0], [0], [1], [0, 0, 1, 1], [], []>} : vector<8x128xf32>, vector<128x384xf32>, vector<8x384xf32> -> vector<8x384xf32>
    %28 = vector.extract_strided_slice %26 {offsets = [0, 0], sizes = [8, 128], strides = [1, 1]} : vector<8x384xf32> to vector<8x128xf32>
    %29 = vector.extract_strided_slice %27 {offsets = [0, 0], sizes = [8, 128], strides = [1, 1]} : vector<8x384xf32> to vector<8x128xf32>
    %30 = arith.addf %28, %29 : vector<8x128xf32>
    %31 = arith.negf %30 : vector<8x128xf32>
    %32 = math.exp %31 : vector<8x128xf32>
    %cst_15 = arith.constant 1.000000e+00 : f32
    %33 = vector.broadcast %cst_15 : f32 to vector<8x128xf32>
    %34 = arith.addf %33, %32 : vector<8x128xf32>
    %35 = arith.divf %33, %34 : vector<8x128xf32>
    %36 = vector.extract_strided_slice %26 {offsets = [0, 128], sizes = [8, 128], strides = [1, 1]} : vector<8x384xf32> to vector<8x128xf32>
    %37 = vector.extract_strided_slice %27 {offsets = [0, 128], sizes = [8, 128], strides = [1, 1]} : vector<8x384xf32> to vector<8x128xf32>
    %38 = arith.addf %36, %37 : vector<8x128xf32>
    %39 = arith.negf %38 : vector<8x128xf32>
    %40 = math.exp %39 : vector<8x128xf32>
    %cst_16 = arith.constant 1.000000e+00 : f32
    %41 = vector.broadcast %cst_16 : f32 to vector<8x128xf32>
    %42 = arith.addf %41, %40 : vector<8x128xf32>
    %43 = arith.divf %41, %42 : vector<8x128xf32>
    %44 = vector.extract_strided_slice %26 {offsets = [0, 256], sizes = [8, 128], strides = [1, 1]} : vector<8x384xf32> to vector<8x128xf32>
    %45 = vector.extract_strided_slice %27 {offsets = [0, 256], sizes = [8, 128], strides = [1, 1]} : vector<8x384xf32> to vector<8x128xf32>
    %46 = arith.mulf %35, %45 : vector<8x128xf32>
    %47 = arith.addf %44, %46 : vector<8x128xf32>
    %48 = math.tanh %47 : vector<8x128xf32>
    %cst_17 = arith.constant 1.000000e+00 : f32
    %49 = vector.broadcast %cst_17 : f32 to vector<8x128xf32>
    %50 = arith.subf %49, %43 : vector<8x128xf32>
    %51 = arith.mulf %50, %48 : vector<8x128xf32>
    %52 = arith.mulf %43, %25 : vector<8x128xf32>
    %53 = arith.addf %51, %52 : vector<8x128xf32>
    %54 = vector.extract_strided_slice %13 {offsets = [16, 0], sizes = [8, 384], strides = [1, 1]} : vector<64x384xf32> to vector<8x384xf32>
    %cst_18 = arith.constant dense<0.000000e+00> : vector<8x384xf32>
    %55 = tpu.matmul %53, %3, %cst_18 {dimension_numbers = #tpu.dot_dimension_numbers<[1], [0], [0], [1], [0, 0, 1, 1], [], []>} : vector<8x128xf32>, vector<128x384xf32>, vector<8x384xf32> -> vector<8x384xf32>
    %56 = vector.extract_strided_slice %54 {offsets = [0, 0], sizes = [8, 128], strides = [1, 1]} : vector<8x384xf32> to vector<8x128xf32>
    %57 = vector.extract_strided_slice %55 {offsets = [0, 0], sizes = [8, 128], strides = [1, 1]} : vector<8x384xf32> to vector<8x128xf32>
    %58 = arith.addf %56, %57 : vector<8x128xf32>
    %59 = arith.negf %58 : vector<8x128xf32>
    %60 = math.exp %59 : vector<8x128xf32>
    %cst_19 = arith.constant 1.000000e+00 : f32
    %61 = vector.broadcast %cst_19 : f32 to vector<8x128xf32>
    %62 = arith.addf %61, %60 : vector<8x128xf32>
    %63 = arith.divf %61, %62 : vector<8x128xf32>
    %64 = vector.extract_strided_slice %54 {offsets = [0, 128], sizes = [8, 128], strides = [1, 1]} : vector<8x384xf32> to vector<8x128xf32>
    %65 = vector.extract_strided_slice %55 {offsets = [0, 128], sizes = [8, 128], strides = [1, 1]} : vector<8x384xf32> to vector<8x128xf32>
    %66 = arith.addf %64, %65 : vector<8x128xf32>
    %67 = arith.negf %66 : vector<8x128xf32>
    %68 = math.exp %67 : vector<8x128xf32>
    %cst_20 = arith.constant 1.000000e+00 : f32
    %69 = vector.broadcast %cst_20 : f32 to vector<8x128xf32>
    %70 = arith.addf %69, %68 : vector<8x128xf32>
    %71 = arith.divf %69, %70 : vector<8x128xf32>
    %72 = vector.extract_strided_slice %54 {offsets = [0, 256], sizes = [8, 128], strides = [1, 1]} : vector<8x384xf32> to vector<8x128xf32>
    %73 = vector.extract_strided_slice %55 {offsets = [0, 256], sizes = [8, 128], strides = [1, 1]} : vector<8x384xf32> to vector<8x128xf32>
    %74 = arith.mulf %63, %73 : vector<8x128xf32>
    %75 = arith.addf %72, %74 : vector<8x128xf32>
    %76 = math.tanh %75 : vector<8x128xf32>
    %cst_21 = arith.constant 1.000000e+00 : f32
    %77 = vector.broadcast %cst_21 : f32 to vector<8x128xf32>
    %78 = arith.subf %77, %71 : vector<8x128xf32>
    %79 = arith.mulf %78, %76 : vector<8x128xf32>
    %80 = arith.mulf %71, %53 : vector<8x128xf32>
    %81 = arith.addf %79, %80 : vector<8x128xf32>
    %82 = vector.extract_strided_slice %13 {offsets = [24, 0], sizes = [8, 384], strides = [1, 1]} : vector<64x384xf32> to vector<8x384xf32>
    %cst_22 = arith.constant dense<0.000000e+00> : vector<8x384xf32>
    %83 = tpu.matmul %81, %3, %cst_22 {dimension_numbers = #tpu.dot_dimension_numbers<[1], [0], [0], [1], [0, 0, 1, 1], [], []>} : vector<8x128xf32>, vector<128x384xf32>, vector<8x384xf32> -> vector<8x384xf32>
    %84 = vector.extract_strided_slice %82 {offsets = [0, 0], sizes = [8, 128], strides = [1, 1]} : vector<8x384xf32> to vector<8x128xf32>
    %85 = vector.extract_strided_slice %83 {offsets = [0, 0], sizes = [8, 128], strides = [1, 1]} : vector<8x384xf32> to vector<8x128xf32>
    %86 = arith.addf %84, %85 : vector<8x128xf32>
    %87 = arith.negf %86 : vector<8x128xf32>
    %88 = math.exp %87 : vector<8x128xf32>
    %cst_23 = arith.constant 1.000000e+00 : f32
    %89 = vector.broadcast %cst_23 : f32 to vector<8x128xf32>
    %90 = arith.addf %89, %88 : vector<8x128xf32>
    %91 = arith.divf %89, %90 : vector<8x128xf32>
    %92 = vector.extract_strided_slice %82 {offsets = [0, 128], sizes = [8, 128], strides = [1, 1]} : vector<8x384xf32> to vector<8x128xf32>
    %93 = vector.extract_strided_slice %83 {offsets = [0, 128], sizes = [8, 128], strides = [1, 1]} : vector<8x384xf32> to vector<8x128xf32>
    %94 = arith.addf %92, %93 : vector<8x128xf32>
    %95 = arith.negf %94 : vector<8x128xf32>
    %96 = math.exp %95 : vector<8x128xf32>
    %cst_24 = arith.constant 1.000000e+00 : f32
    %97 = vector.broadcast %cst_24 : f32 to vector<8x128xf32>
    %98 = arith.addf %97, %96 : vector<8x128xf32>
    %99 = arith.divf %97, %98 : vector<8x128xf32>
    %100 = vector.extract_strided_slice %82 {offsets = [0, 256], sizes = [8, 128], strides = [1, 1]} : vector<8x384xf32> to vector<8x128xf32>
    %101 = vector.extract_strided_slice %83 {offsets = [0, 256], sizes = [8, 128], strides = [1, 1]} : vector<8x384xf32> to vector<8x128xf32>
    %102 = arith.mulf %91, %101 : vector<8x128xf32>
    %103 = arith.addf %100, %102 : vector<8x128xf32>
    %104 = math.tanh %103 : vector<8x128xf32>
    %cst_25 = arith.constant 1.000000e+00 : f32
    %105 = vector.broadcast %cst_25 : f32 to vector<8x128xf32>
    %106 = arith.subf %105, %99 : vector<8x128xf32>
    %107 = arith.mulf %106, %104 : vector<8x128xf32>
    %108 = arith.mulf %99, %81 : vector<8x128xf32>
    %109 = arith.addf %107, %108 : vector<8x128xf32>
    %110 = vector.extract_strided_slice %13 {offsets = [32, 0], sizes = [8, 384], strides = [1, 1]} : vector<64x384xf32> to vector<8x384xf32>
    %cst_26 = arith.constant dense<0.000000e+00> : vector<8x384xf32>
    %111 = tpu.matmul %109, %3, %cst_26 {dimension_numbers = #tpu.dot_dimension_numbers<[1], [0], [0], [1], [0, 0, 1, 1], [], []>} : vector<8x128xf32>, vector<128x384xf32>, vector<8x384xf32> -> vector<8x384xf32>
    %112 = vector.extract_strided_slice %110 {offsets = [0, 0], sizes = [8, 128], strides = [1, 1]} : vector<8x384xf32> to vector<8x128xf32>
    %113 = vector.extract_strided_slice %111 {offsets = [0, 0], sizes = [8, 128], strides = [1, 1]} : vector<8x384xf32> to vector<8x128xf32>
    %114 = arith.addf %112, %113 : vector<8x128xf32>
    %115 = arith.negf %114 : vector<8x128xf32>
    %116 = math.exp %115 : vector<8x128xf32>
    %cst_27 = arith.constant 1.000000e+00 : f32
    %117 = vector.broadcast %cst_27 : f32 to vector<8x128xf32>
    %118 = arith.addf %117, %116 : vector<8x128xf32>
    %119 = arith.divf %117, %118 : vector<8x128xf32>
    %120 = vector.extract_strided_slice %110 {offsets = [0, 128], sizes = [8, 128], strides = [1, 1]} : vector<8x384xf32> to vector<8x128xf32>
    %121 = vector.extract_strided_slice %111 {offsets = [0, 128], sizes = [8, 128], strides = [1, 1]} : vector<8x384xf32> to vector<8x128xf32>
    %122 = arith.addf %120, %121 : vector<8x128xf32>
    %123 = arith.negf %122 : vector<8x128xf32>
    %124 = math.exp %123 : vector<8x128xf32>
    %cst_28 = arith.constant 1.000000e+00 : f32
    %125 = vector.broadcast %cst_28 : f32 to vector<8x128xf32>
    %126 = arith.addf %125, %124 : vector<8x128xf32>
    %127 = arith.divf %125, %126 : vector<8x128xf32>
    %128 = vector.extract_strided_slice %110 {offsets = [0, 256], sizes = [8, 128], strides = [1, 1]} : vector<8x384xf32> to vector<8x128xf32>
    %129 = vector.extract_strided_slice %111 {offsets = [0, 256], sizes = [8, 128], strides = [1, 1]} : vector<8x384xf32> to vector<8x128xf32>
    %130 = arith.mulf %119, %129 : vector<8x128xf32>
    %131 = arith.addf %128, %130 : vector<8x128xf32>
    %132 = math.tanh %131 : vector<8x128xf32>
    %cst_29 = arith.constant 1.000000e+00 : f32
    %133 = vector.broadcast %cst_29 : f32 to vector<8x128xf32>
    %134 = arith.subf %133, %127 : vector<8x128xf32>
    %135 = arith.mulf %134, %132 : vector<8x128xf32>
    %136 = arith.mulf %127, %109 : vector<8x128xf32>
    %137 = arith.addf %135, %136 : vector<8x128xf32>
    %138 = vector.extract_strided_slice %13 {offsets = [40, 0], sizes = [8, 384], strides = [1, 1]} : vector<64x384xf32> to vector<8x384xf32>
    %cst_30 = arith.constant dense<0.000000e+00> : vector<8x384xf32>
    %139 = tpu.matmul %137, %3, %cst_30 {dimension_numbers = #tpu.dot_dimension_numbers<[1], [0], [0], [1], [0, 0, 1, 1], [], []>} : vector<8x128xf32>, vector<128x384xf32>, vector<8x384xf32> -> vector<8x384xf32>
    %140 = vector.extract_strided_slice %138 {offsets = [0, 0], sizes = [8, 128], strides = [1, 1]} : vector<8x384xf32> to vector<8x128xf32>
    %141 = vector.extract_strided_slice %139 {offsets = [0, 0], sizes = [8, 128], strides = [1, 1]} : vector<8x384xf32> to vector<8x128xf32>
    %142 = arith.addf %140, %141 : vector<8x128xf32>
    %143 = arith.negf %142 : vector<8x128xf32>
    %144 = math.exp %143 : vector<8x128xf32>
    %cst_31 = arith.constant 1.000000e+00 : f32
    %145 = vector.broadcast %cst_31 : f32 to vector<8x128xf32>
    %146 = arith.addf %145, %144 : vector<8x128xf32>
    %147 = arith.divf %145, %146 : vector<8x128xf32>
    %148 = vector.extract_strided_slice %138 {offsets = [0, 128], sizes = [8, 128], strides = [1, 1]} : vector<8x384xf32> to vector<8x128xf32>
    %149 = vector.extract_strided_slice %139 {offsets = [0, 128], sizes = [8, 128], strides = [1, 1]} : vector<8x384xf32> to vector<8x128xf32>
    %150 = arith.addf %148, %149 : vector<8x128xf32>
    %151 = arith.negf %150 : vector<8x128xf32>
    %152 = math.exp %151 : vector<8x128xf32>
    %cst_32 = arith.constant 1.000000e+00 : f32
    %153 = vector.broadcast %cst_32 : f32 to vector<8x128xf32>
    %154 = arith.addf %153, %152 : vector<8x128xf32>
    %155 = arith.divf %153, %154 : vector<8x128xf32>
    %156 = vector.extract_strided_slice %138 {offsets = [0, 256], sizes = [8, 128], strides = [1, 1]} : vector<8x384xf32> to vector<8x128xf32>
    %157 = vector.extract_strided_slice %139 {offsets = [0, 256], sizes = [8, 128], strides = [1, 1]} : vector<8x384xf32> to vector<8x128xf32>
    %158 = arith.mulf %147, %157 : vector<8x128xf32>
    %159 = arith.addf %156, %158 : vector<8x128xf32>
    %160 = math.tanh %159 : vector<8x128xf32>
    %cst_33 = arith.constant 1.000000e+00 : f32
    %161 = vector.broadcast %cst_33 : f32 to vector<8x128xf32>
    %162 = arith.subf %161, %155 : vector<8x128xf32>
    %163 = arith.mulf %162, %160 : vector<8x128xf32>
    %164 = arith.mulf %155, %137 : vector<8x128xf32>
    %165 = arith.addf %163, %164 : vector<8x128xf32>
    %166 = vector.extract_strided_slice %13 {offsets = [48, 0], sizes = [8, 384], strides = [1, 1]} : vector<64x384xf32> to vector<8x384xf32>
    %cst_34 = arith.constant dense<0.000000e+00> : vector<8x384xf32>
    %167 = tpu.matmul %165, %3, %cst_34 {dimension_numbers = #tpu.dot_dimension_numbers<[1], [0], [0], [1], [0, 0, 1, 1], [], []>} : vector<8x128xf32>, vector<128x384xf32>, vector<8x384xf32> -> vector<8x384xf32>
    %168 = vector.extract_strided_slice %166 {offsets = [0, 0], sizes = [8, 128], strides = [1, 1]} : vector<8x384xf32> to vector<8x128xf32>
    %169 = vector.extract_strided_slice %167 {offsets = [0, 0], sizes = [8, 128], strides = [1, 1]} : vector<8x384xf32> to vector<8x128xf32>
    %170 = arith.addf %168, %169 : vector<8x128xf32>
    %171 = arith.negf %170 : vector<8x128xf32>
    %172 = math.exp %171 : vector<8x128xf32>
    %cst_35 = arith.constant 1.000000e+00 : f32
    %173 = vector.broadcast %cst_35 : f32 to vector<8x128xf32>
    %174 = arith.addf %173, %172 : vector<8x128xf32>
    %175 = arith.divf %173, %174 : vector<8x128xf32>
    %176 = vector.extract_strided_slice %166 {offsets = [0, 128], sizes = [8, 128], strides = [1, 1]} : vector<8x384xf32> to vector<8x128xf32>
    %177 = vector.extract_strided_slice %167 {offsets = [0, 128], sizes = [8, 128], strides = [1, 1]} : vector<8x384xf32> to vector<8x128xf32>
    %178 = arith.addf %176, %177 : vector<8x128xf32>
    %179 = arith.negf %178 : vector<8x128xf32>
    %180 = math.exp %179 : vector<8x128xf32>
    %cst_36 = arith.constant 1.000000e+00 : f32
    %181 = vector.broadcast %cst_36 : f32 to vector<8x128xf32>
    %182 = arith.addf %181, %180 : vector<8x128xf32>
    %183 = arith.divf %181, %182 : vector<8x128xf32>
    %184 = vector.extract_strided_slice %166 {offsets = [0, 256], sizes = [8, 128], strides = [1, 1]} : vector<8x384xf32> to vector<8x128xf32>
    %185 = vector.extract_strided_slice %167 {offsets = [0, 256], sizes = [8, 128], strides = [1, 1]} : vector<8x384xf32> to vector<8x128xf32>
    %186 = arith.mulf %175, %185 : vector<8x128xf32>
    %187 = arith.addf %184, %186 : vector<8x128xf32>
    %188 = math.tanh %187 : vector<8x128xf32>
    %cst_37 = arith.constant 1.000000e+00 : f32
    %189 = vector.broadcast %cst_37 : f32 to vector<8x128xf32>
    %190 = arith.subf %189, %183 : vector<8x128xf32>
    %191 = arith.mulf %190, %188 : vector<8x128xf32>
    %192 = arith.mulf %183, %165 : vector<8x128xf32>
    %193 = arith.addf %191, %192 : vector<8x128xf32>
    %194 = vector.extract_strided_slice %13 {offsets = [56, 0], sizes = [8, 384], strides = [1, 1]} : vector<64x384xf32> to vector<8x384xf32>
    %cst_38 = arith.constant dense<0.000000e+00> : vector<8x384xf32>
    %195 = tpu.matmul %193, %3, %cst_38 {dimension_numbers = #tpu.dot_dimension_numbers<[1], [0], [0], [1], [0, 0, 1, 1], [], []>} : vector<8x128xf32>, vector<128x384xf32>, vector<8x384xf32> -> vector<8x384xf32>
    %196 = vector.extract_strided_slice %194 {offsets = [0, 0], sizes = [8, 128], strides = [1, 1]} : vector<8x384xf32> to vector<8x128xf32>
    %197 = vector.extract_strided_slice %195 {offsets = [0, 0], sizes = [8, 128], strides = [1, 1]} : vector<8x384xf32> to vector<8x128xf32>
    %198 = arith.addf %196, %197 : vector<8x128xf32>
    %199 = arith.negf %198 : vector<8x128xf32>
    %200 = math.exp %199 : vector<8x128xf32>
    %cst_39 = arith.constant 1.000000e+00 : f32
    %201 = vector.broadcast %cst_39 : f32 to vector<8x128xf32>
    %202 = arith.addf %201, %200 : vector<8x128xf32>
    %203 = arith.divf %201, %202 : vector<8x128xf32>
    %204 = vector.extract_strided_slice %194 {offsets = [0, 128], sizes = [8, 128], strides = [1, 1]} : vector<8x384xf32> to vector<8x128xf32>
    %205 = vector.extract_strided_slice %195 {offsets = [0, 128], sizes = [8, 128], strides = [1, 1]} : vector<8x384xf32> to vector<8x128xf32>
    %206 = arith.addf %204, %205 : vector<8x128xf32>
    %207 = arith.negf %206 : vector<8x128xf32>
    %208 = math.exp %207 : vector<8x128xf32>
    %cst_40 = arith.constant 1.000000e+00 : f32
    %209 = vector.broadcast %cst_40 : f32 to vector<8x128xf32>
    %210 = arith.addf %209, %208 : vector<8x128xf32>
    %211 = arith.divf %209, %210 : vector<8x128xf32>
    %212 = vector.extract_strided_slice %194 {offsets = [0, 256], sizes = [8, 128], strides = [1, 1]} : vector<8x384xf32> to vector<8x128xf32>
    %213 = vector.extract_strided_slice %195 {offsets = [0, 256], sizes = [8, 128], strides = [1, 1]} : vector<8x384xf32> to vector<8x128xf32>
    %214 = arith.mulf %203, %213 : vector<8x128xf32>
    %215 = arith.addf %212, %214 : vector<8x128xf32>
    %216 = math.tanh %215 : vector<8x128xf32>
    %cst_41 = arith.constant 1.000000e+00 : f32
    %217 = vector.broadcast %cst_41 : f32 to vector<8x128xf32>
    %218 = arith.subf %217, %211 : vector<8x128xf32>
    %219 = arith.mulf %218, %216 : vector<8x128xf32>
    %220 = arith.mulf %211, %193 : vector<8x128xf32>
    %221 = arith.addf %219, %220 : vector<8x128xf32>
    %cst_42 = arith.constant dense<0.000000e+00> : vector<8x128xf32>
    %222 = tpu.matmul %221, %4, %cst_42 {dimension_numbers = #tpu.dot_dimension_numbers<[1], [0], [0], [1], [0, 0, 1, 1], [], []>} : vector<8x128xf32>, vector<128x128xf32>, vector<8x128xf32> -> vector<8x128xf32>
    %cst_43 = arith.constant 0.000000e+00 : f32
    %223 = vector.broadcast %cst_43 : f32 to vector<8x128xf32>
    %224 = arith.maximumf %222, %223 : vector<8x128xf32>
    %cst_44 = arith.constant dense<0.000000e+00> : vector<8x128xf32>
    %225 = tpu.matmul %224, %5, %cst_44 {dimension_numbers = #tpu.dot_dimension_numbers<[1], [0], [0], [1], [0, 0, 1, 1], [], []>} : vector<8x128xf32>, vector<128x128xf32>, vector<8x128xf32> -> vector<8x128xf32>
    %c0_45 = arith.constant 0 : index
    %c0_46 = arith.constant 0 : index
    %226 = vector.load %arg2[%c0_45, %c0_46] : memref<8x128xf32, #tpu.memory_space<vmem>>, vector<8x128xf32>
    tpu.vector_store %arg2[%c0_45, %c0_46], %225 {strides = array<i32>} : memref<8x128xf32, #tpu.memory_space<vmem>>, vector<8x128xf32>,
    return
  }
}

</mosaic_0001>

<llo_original>
// kernel: pretext_encoder_forward.1
$region0: #{pretext_encoder_forward.1}
  #allocation0 [shape = 'u32[]', space=smem, size = 0x4, offset = 0x4, fixed_abs, tag = 'smem constant byte address 0x4 - core index']
  #allocation1 [shape = 'u32[144,128]{1,0:T(1,128)}', space=vmem, size = 0x12000, scoped, tag = 'internal scratch']
  %s0 = inlined_call_operand.vmem [shape: f32[64,128], index: 0, kind: input, shape index: {}]
  %s1 = inlined_call_operand.hbm [shape: f32[128,1280], index: 1, kind: input, shape index: {}]
  %s2 = inlined_call_operand.vmem [shape: f32[8,128], index: 2, kind: output, shape index: {}]
  %s3 = sld [smem:[#allocation0]]
  $region22: #{pretext_encoder_forward.1} parent=0
    _
  %s5 = ssub.s32 1, %s3
  %s6 = scalar_select 0, %s5, %s3
  $region1: #{pretext_encoder_forward.1} parent=0
    #allocation2 [shape = 'u8[655360]{0}', space=vmem, size = 0xa0000, scoped, tag = 'input window, operand 1, single buffered']
    #allocation3 [shape = 's32[1]{0}', space=sflag, size = 0x4, scoped, tag = 'scoped memory for pretext_encoder_forward.1']
    %7 = vsyncpa [#allocation3], 0
    // Predicated region
    $region2: #{pretext_encoder_forward.1} parent=1 // pred_check
      _
    $region3: #{pretext_encoder_forward.1} parent=1 // pred_check_branch
      %9 = sbr.rel (0) target = $region5
    $region4: #{pretext_encoder_forward.1} parent=1 // pred_region
      _
    $region5: #{pretext_encoder_forward.1} parent=1 // pred_fallthru
      _
    // Predicated region
    $region6: #{pretext_encoder_forward.1} parent=1 // pred_check
      _
    $region7: #{pretext_encoder_forward.1} parent=1 // pred_check_branch
      %11 = sbr.rel (0) target = $region9
    $region8: #{pretext_encoder_forward.1} parent=1 // pred_region
      %s13 = ssub.s32 20480, 20480
      %14 = vsyncadd [#allocation3], %s13
      %s15 = sshll.u32 [#allocation2], 4
      %s16 = int_to_ptr.vmem [resolvable:$true] %s15
      %21 = dma.hbm_to_vmem [thread:$0]  %s1, 20480, %s16, [#allocation3], 1280, 1280, 80
    $region9: #{pretext_encoder_forward.1} parent=1 // pred_fallthru
      _
    // Predicated region
    $region10: #{pretext_encoder_forward.1} parent=1 // pred_check
      _
    $region11: #{pretext_encoder_forward.1} parent=1 // pred_check_branch
      %23 = sbr.rel (0) target = $region13
    $region12: #{pretext_encoder_forward.1} parent=1 // pred_region
      %24 = dma.done [#allocation3], 20480
    $region13: #{pretext_encoder_forward.1} parent=1 // pred_fallthru
      _
    %v25 = vld [vmem:[#allocation2] sm:$0xff]
    %v26 = vld [vmem:[#allocation2 + $0x50] sm:$0xff]
    %v27 = vld [vmem:[#allocation2 + $0xa0] sm:$0xff]
    %v28 = vld [vmem:[#allocation2 + $0xf0] sm:$0xff]
    %v29 = vld [vmem:[#allocation2 + $0x140] sm:$0xff]
    %v30 = vld [vmem:[#allocation2 + $0x190] sm:$0xff]
    %v31 = vld [vmem:[#allocation2 + $0x1e0] sm:$0xff]
    %v32 = vld [vmem:[#allocation2 + $0x230] sm:$0xff]
    %v33 = vld [vmem:[#allocation2 + $0x280] sm:$0xff]
    %v34 = vld [vmem:[#allocation2 + $0x2d0] sm:$0xff]
    %v35 = vld [vmem:[#allocation2 + $0x320] sm:$0xff]
    %v36 = vld [vmem:[#allocation2 + $0x370] sm:$0xff]
    %v37 = vld [vmem:[#allocation2 + $0x3c0] sm:$0xff]
    %v38 = vld [vmem:[#allocation2 + $0x410] sm:$0xff]
    %v39 = vld [vmem:[#allocation2 + $0x460] sm:$0xff]
    %v40 = vld [vmem:[#allocation2 + $0x4b0] sm:$0xff]
    %v41 = vld [vmem:[#allocation2 + $0x8] sm:$0xff]
    %v42 = vld [vmem:[#allocation2 + $0x58] sm:$0xff]
    %v43 = vld [vmem:[#allocation2 + $0xa8] sm:$0xff]
    %v44 = vld [vmem:[#allocation2 + $0xf8] sm:$0xff]
    %v45 = vld [vmem:[#allocation2 + $0x148] sm:$0xff]
    %v46 = vld [vmem:[#allocation2 + $0x198] sm:$0xff]
    %v47 = vld [vmem:[#allocation2 + $0x1e8] sm:$0xff]
    %v48 = vld [vmem:[#allocation2 + $0x238] sm:$0xff]
    %v49 = vld [vmem:[#allocation2 + $0x288] sm:$0xff]
    %v50 = vld [vmem:[#allocation2 + $0x2d8] sm:$0xff]
    %v51 = vld [vmem:[#allocation2 + $0x328] sm:$0xff]
    %v52 = vld [vmem:[#allocation2 + $0x378] sm:$0xff]
    %v53 = vld [vmem:[#allocation2 + $0x3c8] sm:$0xff]
    %v54 = vld [vmem:[#allocation2 + $0x418] sm:$0xff]
    %v55 = vld [vmem:[#allocation2 + $0x468] sm:$0xff]
    %v56 = vld [vmem:[#allocation2 + $0x4b8] sm:$0xff]
    %v57 = vld [vmem:[#allocation2 + $0x10] sm:$0xff]
    %v58 = vld [vmem:[#allocation2 + $0x18] sm:$0xff]
    %v59 = vld [vmem:[#allocation2 + $0x20] sm:$0xff]
    %v60 = vld [vmem:[#allocation2 + $0x60] sm:$0xff]
    %v61 = vld [vmem:[#allocation2 + $0x68] sm:$0xff]
    %v62 = vld [vmem:[#allocation2 + $0x70] sm:$0xff]
    %v63 = vld [vmem:[#allocation2 + $0xb0] sm:$0xff]
    %v64 = vld [vmem:[#allocation2 + $0xb8] sm:$0xff]
    %v65 = vld [vmem:[#allocation2 + $0xc0] sm:$0xff]
    %v66 = vld [vmem:[#allocation2 + $0x100] sm:$0xff]
    %v67 = vld [vmem:[#allocation2 + $0x108] sm:$0xff]
    %v68 = vld [vmem:[#allocation2 + $0x110] sm:$0xff]
    %v69 = vld [vmem:[#allocation2 + $0x150] sm:$0xff]
    %v70 = vld [vmem:[#allocation2 + $0x158] sm:$0xff]
    %v71 = vld [vmem:[#allocation2 + $0x160] sm:$0xff]
    %v72 = vld [vmem:[#allocation2 + $0x1a0] sm:$0xff]
    %v73 = vld [vmem:[#allocation2 + $0x1a8] sm:$0xff]
    %v74 = vld [vmem:[#allocation2 + $0x1b0] sm:$0xff]
    %v75 = vld [vmem:[#allocation2 + $0x1f0] sm:$0xff]
    %v76 = vld [vmem:[#allocation2 + $0x1f8] sm:$0xff]
    %v77 = vld [vmem:[#allocation2 + $0x200] sm:$0xff]
    %v78 = vld [vmem:[#allocation2 + $0x240] sm:$0xff]
    %v79 = vld [vmem:[#allocation2 + $0x248] sm:$0xff]
    %v80 = vld [vmem:[#allocation2 + $0x250] sm:$0xff]
    %v81 = vld [vmem:[#allocation2 + $0x290] sm:$0xff]
    %v82 = vld [vmem:[#allocation2 + $0x298] sm:$0xff]
    %v83 = vld [vmem:[#allocation2 + $0x2a0] sm:$0xff]
    %v84 = vld [vmem:[#allocation2 + $0x2e0] sm:$0xff]
    %v85 = vld [vmem:[#allocation2 + $0x2e8] sm:$0xff]
    %v86 = vld [vmem:[#allocation2 + $0x2f0] sm:$0xff]
    %v87 = vld [vmem:[#allocation2 + $0x330] sm:$0xff]
    %v88 = vld [vmem:[#allocation2 + $0x338] sm:$0xff]
    %v89 = vld [vmem:[#allocation2 + $0x340] sm:$0xff]
    %v90 = vld [vmem:[#allocation2 + $0x380] sm:$0xff]
    %v91 = vld [vmem:[#allocation2 + $0x388] sm:$0xff]
    %v92 = vld [vmem:[#allocation2 + $0x390] sm:$0xff]
    %v93 = vld [vmem:[#allocation2 + $0x3d0] sm:$0xff]
    %v94 = vld [vmem:[#allocation2 + $0x3d8] sm:$0xff]
    %v95 = vld [vmem:[#allocation2 + $0x3e0] sm:$0xff]
    %v96 = vld [vmem:[#allocation2 + $0x420] sm:$0xff]
    %v97 = vld [vmem:[#allocation2 + $0x428] sm:$0xff]
    %v98 = vld [vmem:[#allocation2 + $0x430] sm:$0xff]
    %v99 = vld [vmem:[#allocation2 + $0x470] sm:$0xff]
    %v100 = vld [vmem:[#allocation2 + $0x478] sm:$0xff]
    %v101 = vld [vmem:[#allocation2 + $0x480] sm:$0xff]
    %v102 = vld [vmem:[#allocation2 + $0x4c0] sm:$0xff]
    %v103 = vld [vmem:[#allocation2 + $0x4c8] sm:$0xff]
    %v104 = vld [vmem:[#allocation2 + $0x4d0] sm:$0xff]
    %v105 = vld [vmem:[#allocation2 + $0x28] sm:$0xff]
    %v106 = vld [vmem:[#allocation2 + $0x30] sm:$0xff]
    %v107 = vld [vmem:[#allocation2 + $0x38] sm:$0xff]
    %v108 = vld [vmem:[#allocation2 + $0x78] sm:$0xff]
    %v109 = vld [vmem:[#allocation2 + $0x80] sm:$0xff]
    %v110 = vld [vmem:[#allocation2 + $0x88] sm:$0xff]
    %v111 = vld [vmem:[#allocation2 + $0xc8] sm:$0xff]
    %v112 = vld [vmem:[#allocation2 + $0xd0] sm:$0xff]
    %v113 = vld [vmem:[#allocation2 + $0xd8] sm:$0xff]
    %v114 = vld [vmem:[#allocation2 + $0x118] sm:$0xff]
    %v115 = vld [vmem:[#allocation2 + $0x120] sm:$0xff]
    %v116 = vld [vmem:[#allocation2 + $0x128] sm:$0xff]
    %v117 = vld [vmem:[#allocation2 + $0x168] sm:$0xff]
    %v118 = vld [vmem:[#allocation2 + $0x170] sm:$0xff]
    %v119 = vld [vmem:[#allocation2 + $0x178] sm:$0xff]
    %v120 = vld [vmem:[#allocation2 + $0x1b8] sm:$0xff]
    %v121 = vld [vmem:[#allocation2 + $0x1c0] sm:$0xff]
    %v122 = vld [vmem:[#allocation2 + $0x1c8] sm:$0xff]
    %v123 = vld [vmem:[#allocation2 + $0x208] sm:$0xff]
    %v124 = vld [vmem:[#allocation2 + $0x210] sm:$0xff]
    %v125 = vld [vmem:[#allocation2 + $0x218] sm:$0xff]
    %v126 = vld [vmem:[#allocation2 + $0x258] sm:$0xff]
    %v127 = vld [vmem:[#allocation2 + $0x260] sm:$0xff]
    %v128 = vld [vmem:[#allocation2 + $0x268] sm:$0xff]
    %v129 = vld [vmem:[#allocation2 + $0x2a8] sm:$0xff]
    %v130 = vld [vmem:[#allocation2 + $0x2b0] sm:$0xff]
    %v131 = vld [vmem:[#allocation2 + $0x2b8] sm:$0xff]
    %v132 = vld [vmem:[#allocation2 + $0x2f8] sm:$0xff]
    %v133 = vld [vmem:[#allocation2 + $0x300] sm:$0xff]
    %v134 = vld [vmem:[#allocation2 + $0x308] sm:$0xff]
    %v135 = vld [vmem:[#allocation2 + $0x348] sm:$0xff]
    %v136 = vld [vmem:[#allocation2 + $0x350] sm:$0xff]
    %v137 = vld [vmem:[#allocation2 + $0x358] sm:$0xff]
    %v138 = vld [vmem:[#allocation2 + $0x398] sm:$0xff]
    %v139 = vld [vmem:[#allocation2 + $0x3a0] sm:$0xff]
    %v140 = vld [vmem:[#allocation2 + $0x3a8] sm:$0xff]
    %v141 = vld [vmem:[#allocation2 + $0x3e8] sm:$0xff]
    %v142 = vld [vmem:[#allocation2 + $0x3f0] sm:$0xff]
    %v143 = vld [vmem:[#allocation2 + $0x3f8] sm:$0xff]
    %v144 = vld [vmem:[#allocation2 + $0x438] sm:$0xff]
    %v145 = vld [vmem:[#allocation2 + $0x440] sm:$0xff]
    %v146 = vld [vmem:[#allocation2 + $0x448] sm:$0xff]
    %v147 = vld [vmem:[#allocation2 + $0x488] sm:$0xff]
    %v148 = vld [vmem:[#allocation2 + $0x490] sm:$0xff]
    %v149 = vld [vmem:[#allocation2 + $0x498] sm:$0xff]
    %v150 = vld [vmem:[#allocation2 + $0x4d8] sm:$0xff]
    %v151 = vld [vmem:[#allocation2 + $0x4e0] sm:$0xff]
    %v152 = vld [vmem:[#allocation2 + $0x4e8] sm:$0xff]
    %v153 = vld [vmem:[#allocation2 + $0x40] sm:$0xff]
    %v154 = vld [vmem:[#allocation2 + $0x90] sm:$0xff]
    %v155 = vld [vmem:[#allocation2 + $0xe0] sm:$0xff]
    %v156 = vld [vmem:[#allocation2 + $0x130] sm:$0xff]
    %v157 = vld [vmem:[#allocation2 + $0x180] sm:$0xff]
    %v158 = vld [vmem:[#allocation2 + $0x1d0] sm:$0xff]
    %v159 = vld [vmem:[#allocation2 + $0x220] sm:$0xff]
    %v160 = vld [vmem:[#allocation2 + $0x270] sm:$0xff]
    %v161 = vld [vmem:[#allocation2 + $0x2c0] sm:$0xff]
    %v162 = vld [vmem:[#allocation2 + $0x310] sm:$0xff]
    %v163 = vld [vmem:[#allocation2 + $0x360] sm:$0xff]
    %v164 = vld [vmem:[#allocation2 + $0x3b0] sm:$0xff]
    %v165 = vld [vmem:[#allocation2 + $0x400] sm:$0xff]
    %v166 = vld [vmem:[#allocation2 + $0x450] sm:$0xff]
    %v167 = vld [vmem:[#allocation2 + $0x4a0] sm:$0xff]
    %v168 = vld [vmem:[#allocation2 + $0x4f0] sm:$0xff]
    %v169 = vld [vmem:[#allocation2 + $0x48] sm:$0xff]
    %v170 = vld [vmem:[#allocation2 + $0x98] sm:$0xff]
    %v171 = vld [vmem:[#allocation2 + $0xe8] sm:$0xff]
    %v172 = vld [vmem:[#allocation2 + $0x138] sm:$0xff]
    %v173 = vld [vmem:[#allocation2 + $0x188] sm:$0xff]
    %v174 = vld [vmem:[#allocation2 + $0x1d8] sm:$0xff]
    %v175 = vld [vmem:[#allocation2 + $0x228] sm:$0xff]
    %v176 = vld [vmem:[#allocation2 + $0x278] sm:$0xff]
    %v177 = vld [vmem:[#allocation2 + $0x2c8] sm:$0xff]
    %v178 = vld [vmem:[#allocation2 + $0x318] sm:$0xff]
    %v179 = vld [vmem:[#allocation2 + $0x368] sm:$0xff]
    %v180 = vld [vmem:[#allocation2 + $0x3b8] sm:$0xff]
    %v181 = vld [vmem:[#allocation2 + $0x408] sm:$0xff]
    %v182 = vld [vmem:[#allocation2 + $0x458] sm:$0xff]
    %v183 = vld [vmem:[#allocation2 + $0x4a8] sm:$0xff]
    %v184 = vld [vmem:[#allocation2 + $0x4f8] sm:$0xff]
    %v185 = vld [vmem:[%s0] sm:$0xff]
    %v186 = vld [vmem:[%s0 + $0x8] sm:$0xff]
    %v187 = vld [vmem:[%s0 + $0x10] sm:$0xff]
    %v188 = vld [vmem:[%s0 + $0x18] sm:$0xff]
    %v189 = vld [vmem:[%s0 + $0x20] sm:$0xff]
    %v190 = vld [vmem:[%s0 + $0x28] sm:$0xff]
    %v191 = vld [vmem:[%s0 + $0x30] sm:$0xff]
    %v192 = vld [vmem:[%s0 + $0x38] sm:$0xff]
    %193 = vmatprep.subr.mxu0 0.0
    %194 = vmatpush1.msra.mxu0 %v40
    %195 = vmatprep.subr.mxu0 0.0
    %196 = vmatpush1.msra.mxu0 %v39
    %197 = vmatprep.subr.mxu0 0.0
    %198 = vmatpush1.msra.mxu0 %v38
    %199 = vmatprep.subr.mxu0 0.0
    %200 = vmatpush1.msra.mxu0 %v37
    %201 = vmatprep.subr.mxu0 0.0
    %202 = vmatpush1.msra.mxu0 %v36
    %203 = vmatprep.subr.mxu0 0.0
    %204 = vmatpush1.msra.mxu0 %v35
    %205 = vmatprep.subr.mxu0 0.0
    %206 = vmatpush1.msra.mxu0 %v34
    %207 = vmatprep.subr.mxu0 0.0
    %208 = vmatpush1.msra.mxu0 %v33
    %209 = vmatprep.subr.mxu0 0.0
    %210 = vmatpush1.msra.mxu0 %v32
    %211 = vmatprep.subr.mxu0 0.0
    %212 = vmatpush1.msra.mxu0 %v31
    %213 = vmatprep.subr.mxu0 0.0
    %214 = vmatpush1.msra.mxu0 %v30
    %215 = vmatprep.subr.mxu0 0.0
    %216 = vmatpush1.msra.mxu0 %v29
    %217 = vmatprep.subr.mxu0 0.0
    %218 = vmatpush1.msra.mxu0 %v28
    %219 = vmatprep.subr.mxu0 0.0
    %220 = vmatpush1.msra.mxu0 %v27
    %221 = vmatprep.subr.mxu0 0.0
    %222 = vmatpush1.msra.mxu0 %v26
    %223 = vmatprep.subr.mxu0 0.0
    %224 = vmatpush1.msra.mxu0 %v25
    %225 = vmatprep.subr.mxu0 0.0
    %226 = vmatpush2.msra.mxu0 0.0
    %227 = vmatprep.subr.mxu0 0.0
    %228 = vmatpush2.msra.mxu0 0.0
    %229 = vmatprep.subr.mxu0 0.0
    %230 = vmatpush2.msra.mxu0 0.0
    %231 = vmatprep.subr.mxu0 0.0
    %232 = vmatpush2.msra.mxu0 0.0
    %233 = vmatprep.subr.mxu0 0.0
    %234 = vmatpush2.msra.mxu0 0.0
    %235 = vmatprep.subr.mxu0 0.0
    %236 = vmatpush2.msra.mxu0 0.0
    %237 = vmatprep.subr.mxu0 0.0
    %238 = vmatpush2.msra.mxu0 0.0
    %239 = vmatprep.subr.mxu0 0.0
    %240 = vmatpush2.msra.mxu0 0.0
    %241 = vmatprep.subr.mxu0 0.0
    %242 = vmatpush2.msra.mxu0 0.0
    %243 = vmatprep.subr.mxu0 0.0
    %244 = vmatpush2.msra.mxu0 0.0
    %245 = vmatprep.subr.mxu0 0.0
    %246 = vmatpush2.msra.mxu0 0.0
    %247 = vmatprep.subr.mxu0 0.0
    %248 = vmatpush2.msra.mxu0 0.0
    %249 = vmatprep.subr.mxu0 0.0
    %250 = vmatpush2.msra.mxu0 0.0
    %251 = vmatprep.subr.mxu0 0.0
    %252 = vmatpush2.msra.mxu0 0.0
    %253 = vmatprep.subr.mxu0 0.0
    %254 = vmatpush2.msra.mxu0 0.0
    %255 = vmatprep.subr.mxu0 0.0
    %256 = vmatpush2.msra.mxu0 0.0
    %257 = vmatprep.mubr.f32.mxu0 0.0
    %258 = vmatmul.mubr.f32.gmra.mxu0 %v185
    %v259 = vpop.f32.mrf.mxu0
    %v260 = vadd.f32 0.0, %v259
    %v261 = vpop.f32.mrf.mxu0
    %262 = vmatprep.mubr.f32.mxu0 0.0
    %263 = vmatmul.mubr.f32.gmra.mxu0 %v186
    %v264 = vpop.f32.mrf.mxu0
    %v265 = vadd.f32 0.0, %v264
    %v266 = vpop.f32.mrf.mxu0
    %267 = vmatprep.mubr.f32.mxu0 0.0
    %268 = vmatmul.mubr.f32.gmra.mxu0 %v187
    %v269 = vpop.f32.mrf.mxu0
    %v270 = vadd.f32 0.0, %v269
    %v271 = vpop.f32.mrf.mxu0
    %272 = vmatprep.mubr.f32.mxu0 0.0
    %273 = vmatmul.mubr.f32.gmra.mxu0 %v188
    %v274 = vpop.f32.mrf.mxu0
    %v275 = vadd.f32 0.0, %v274
    %v276 = vpop.f32.mrf.mxu0
    %277 = vmatprep.mubr.f32.mxu0 0.0
    %278 = vmatmul.mubr.f32.gmra.mxu0 %v189
    %v279 = vpop.f32.mrf.mxu0
    %v280 = vadd.f32 0.0, %v279
    %v281 = vpop.f32.mrf.mxu0
    %282 = vmatprep.mubr.f32.mxu0 0.0
    %283 = vmatmul.mubr.f32.gmra.mxu0 %v190
    %v284 = vpop.f32.mrf.mxu0
    %v285 = vadd.f32 0.0, %v284
    %v286 = vpop.f32.mrf.mxu0
    %287 = vmatprep.mubr.f32.mxu0 0.0
    %288 = vmatmul.mubr.f32.gmra.mxu0 %v191
    %v289 = vpop.f32.mrf.mxu0
    %v290 = vadd.f32 0.0, %v289
    %v291 = vpop.f32.mrf.mxu0
    %292 = vmatprep.mubr.f32.mxu0 0.0
    %293 = vmatmul.mubr.f32.gmra.mxu0 %v192
    %v294 = vpop.f32.mrf.mxu0
    %v295 = vadd.f32 0.0, %v294
    %v296 = vpop.f32.mrf.mxu0
    %297 = vdwg.mxu0
    %v298 = vmax.f32 %v260, 0.0
    %v299 = vmax.f32 %v265, 0.0
    %v300 = vmax.f32 %v270, 0.0
    %v301 = vmax.f32 %v275, 0.0
    %v302 = vmax.f32 %v280, 0.0
    %v303 = vmax.f32 %v285, 0.0
    %v304 = vmax.f32 %v290, 0.0
    %v305 = vmax.f32 %v295, 0.0
    %306 = vmatprep.subr.mxu0 0.0
    %307 = vmatpush1.msra.mxu0 %v56
    %308 = vmatprep.subr.mxu0 0.0
    %309 = vmatpush1.msra.mxu0 %v55
    %310 = vmatprep.subr.mxu0 0.0
    %311 = vmatpush1.msra.mxu0 %v54
    %312 = vmatprep.subr.mxu0 0.0
    %313 = vmatpush1.msra.mxu0 %v53
    %314 = vmatprep.subr.mxu0 0.0
    %315 = vmatpush1.msra.mxu0 %v52
    %316 = vmatprep.subr.mxu0 0.0
    %317 = vmatpush1.msra.mxu0 %v51
    %318 = vmatprep.subr.mxu0 0.0
    %319 = vmatpush1.msra.mxu0 %v50
    %320 = vmatprep.subr.mxu0 0.0
    %321 = vmatpush1.msra.mxu0 %v49
    %322 = vmatprep.subr.mxu0 0.0
    %323 = vmatpush1.msra.mxu0 %v48
    %324 = vmatprep.subr.mxu0 0.0
    %325 = vmatpush1.msra.mxu0 %v47
    %326 = vmatprep.subr.mxu0 0.0
    %327 = vmatpush1.msra.mxu0 %v46
    %328 = vmatprep.subr.mxu0 0.0
    %329 = vmatpush1.msra.mxu0 %v45
    %330 = vmatprep.subr.mxu0 0.0
    %331 = vmatpush1.msra.mxu0 %v44
    %332 = vmatprep.subr.mxu0 0.0
    %333 = vmatpush1.msra.mxu0 %v43
    %334 = vmatprep.subr.mxu0 0.0
    %335 = vmatpush1.msra.mxu0 %v42
    %336 = vmatprep.subr.mxu0 0.0
    %337 = vmatpush1.msra.mxu0 %v41
    %338 = vmatprep.subr.mxu0 0.0
    %339 = vmatpush2.msra.mxu0 0.0
    %340 = vmatprep.subr.mxu0 0.0
    %341 = vmatpush2.msra.mxu0 0.0
    %342 = vmatprep.subr.mxu0 0.0
    %343 = vmatpush2.msra.mxu0 0.0
    %344 = vmatprep.subr.mxu0 0.0
    %345 = vmatpush2.msra.mxu0 0.0
    %346 = vmatprep.subr.mxu0 0.0
    %347 = vmatpush2.msra.mxu0 0.0
    %348 = vmatprep.subr.mxu0 0.0
    %349 = vmatpush2.msra.mxu0 0.0
    %350 = vmatprep.subr.mxu0 0.0
    %351 = vmatpush2.msra.mxu0 0.0
    %352 = vmatprep.subr.mxu0 0.0
    %353 = vmatpush2.msra.mxu0 0.0
    %354 = vmatprep.subr.mxu0 0.0
    %355 = vmatpush2.msra.mxu0 0.0
    %356 = vmatprep.subr.mxu0 0.0
    %357 = vmatpush2.msra.mxu0 0.0
    %358 = vmatprep.subr.mxu0 0.0
    %359 = vmatpush2.msra.mxu0 0.0
    %360 = vmatprep.subr.mxu0 0.0
    %361 = vmatpush2.msra.mxu0 0.0
    %362 = vmatprep.subr.mxu0 0.0
    %363 = vmatpush2.msra.mxu0 0.0
    %364 = vmatprep.subr.mxu0 0.0
    %365 = vmatpush2.msra.mxu0 0.0
    %366 = vmatprep.subr.mxu0 0.0
    %367 = vmatpush2.msra.mxu0 0.0
    %368 = vmatprep.subr.mxu0 0.0
    %369 = vmatpush2.msra.mxu0 0.0
    %370 = vmatprep.mubr.f32.mxu0 0.0
    %371 = vmatmul.mubr.f32.gmra.mxu0 %v298
    %v372 = vpop.f32.mrf.mxu0
    %v373 = vadd.f32 0.0, %v372
    %v374 = vpop.f32.mrf.mxu0
    %375 = vmatprep.mubr.f32.mxu0 0.0
    %376 = vmatmul.mubr.f32.gmra.mxu0 %v299
    %v377 = vpop.f32.mrf.mxu0
    %v378 = vadd.f32 0.0, %v377
    %v379 = vpop.f32.mrf.mxu0
    %380 = vmatprep.mubr.f32.mxu0 0.0
    %381 = vmatmul.mubr.f32.gmra.mxu0 %v300
    %v382 = vpop.f32.mrf.mxu0
    %v383 = vadd.f32 0.0, %v382
    %v384 = vpop.f32.mrf.mxu0
    %385 = vmatprep.mubr.f32.mxu0 0.0
    %386 = vmatmul.mubr.f32.gmra.mxu0 %v301
    %v387 = vpop.f32.mrf.mxu0
    %v388 = vadd.f32 0.0, %v387
    %v389 = vpop.f32.mrf.mxu0
    %390 = vmatprep.mubr.f32.mxu0 0.0
    %391 = vmatmul.mubr.f32.gmra.mxu0 %v302
    %v392 = vpop.f32.mrf.mxu0
    %v393 = vadd.f32 0.0, %v392
    %v394 = vpop.f32.mrf.mxu0
    %395 = vmatprep.mubr.f32.mxu0 0.0
    %396 = vmatmul.mubr.f32.gmra.mxu0 %v303
    %v397 = vpop.f32.mrf.mxu0
    %v398 = vadd.f32 0.0, %v397
    %v399 = vpop.f32.mrf.mxu0
    %400 = vmatprep.mubr.f32.mxu0 0.0
    %401 = vmatmul.mubr.f32.gmra.mxu0 %v304
    %v402 = vpop.f32.mrf.mxu0
    %v403 = vadd.f32 0.0, %v402
    %v404 = vpop.f32.mrf.mxu0
    %405 = vmatprep.mubr.f32.mxu0 0.0
    %406 = vmatmul.mubr.f32.gmra.mxu0 %v305
    %v407 = vpop.f32.mrf.mxu0
    %v408 = vadd.f32 0.0, %v407
    %v409 = vpop.f32.mrf.mxu0
    %410 = vdwg.mxu0
    %v411 = vmax.f32 %v373, 0.0
    %v412 = vmax.f32 %v378, 0.0
    %v413 = vmax.f32 %v383, 0.0
    %v414 = vmax.f32 %v388, 0.0
    %v415 = vmax.f32 %v393, 0.0
    %v416 = vmax.f32 %v398, 0.0
    %v417 = vmax.f32 %v403, 0.0
    %v418 = vmax.f32 %v408, 0.0
    %419 = vmatprep.subr.mxu0 %v103
    %420 = vmatpush1.msra.mxu0 %v102
    %421 = vmatprep.subr.mxu0 %v100
    %422 = vmatpush1.msra.mxu0 %v99
    %423 = vmatprep.subr.mxu0 %v97
    %424 = vmatpush1.msra.mxu0 %v96
    %425 = vmatprep.subr.mxu0 %v94
    %426 = vmatpush1.msra.mxu0 %v93
    %427 = vmatprep.subr.mxu0 %v91
    %428 = vmatpush1.msra.mxu0 %v90
    %429 = vmatprep.subr.mxu0 %v88
    %430 = vmatpush1.msra.mxu0 %v87
    %431 = vmatprep.subr.mxu0 %v85
    %432 = vmatpush1.msra.mxu0 %v84
    %433 = vmatprep.subr.mxu0 %v82
    %434 = vmatpush1.msra.mxu0 %v81
    %435 = vmatprep.subr.mxu0 %v79
    %436 = vmatpush1.msra.mxu0 %v78
    %437 = vmatprep.subr.mxu0 %v76
    %438 = vmatpush1.msra.mxu0 %v75
    %439 = vmatprep.subr.mxu0 %v73
    %440 = vmatpush1.msra.mxu0 %v72
    %441 = vmatprep.subr.mxu0 %v70
    %442 = vmatpush1.msra.mxu0 %v69
    %443 = vmatprep.subr.mxu0 %v67
    %444 = vmatpush1.msra.mxu0 %v66
    %445 = vmatprep.subr.mxu0 %v64
    %446 = vmatpush1.msra.mxu0 %v63
    %447 = vmatprep.subr.mxu0 %v61
    %448 = vmatpush1.msra.mxu0 %v60
    %449 = vmatprep.subr.mxu0 %v58
    %450 = vmatpush1.msra.mxu0 %v57
    %451 = vmatprep.subr.mxu0 0.0
    %452 = vmatpush2.msra.mxu0 0.0
    %453 = vmatprep.subr.mxu0 0.0
    %454 = vmatpush2.msra.mxu0 0.0
    %455 = vmatprep.subr.mxu0 0.0
    %456 = vmatpush2.msra.mxu0 0.0
    %457 = vmatprep.subr.mxu0 0.0
    %458 = vmatpush2.msra.mxu0 0.0
    %459 = vmatprep.subr.mxu0 0.0
    %460 = vmatpush2.msra.mxu0 0.0
    %461 = vmatprep.subr.mxu0 0.0
    %462 = vmatpush2.msra.mxu0 0.0
    %463 = vmatprep.subr.mxu0 0.0
    %464 = vmatpush2.msra.mxu0 0.0
    %465 = vmatprep.subr.mxu0 0.0
    %466 = vmatpush2.msra.mxu0 0.0
    %467 = vmatprep.subr.mxu0 0.0
    %468 = vmatpush2.msra.mxu0 0.0
    %469 = vmatprep.subr.mxu0 0.0
    %470 = vmatpush2.msra.mxu0 0.0
    %471 = vmatprep.subr.mxu0 0.0
    %472 = vmatpush2.msra.mxu0 0.0
    %473 = vmatprep.subr.mxu0 0.0
    %474 = vmatpush2.msra.mxu0 0.0
    %475 = vmatprep.subr.mxu0 0.0
    %476 = vmatpush2.msra.mxu0 0.0
    %477 = vmatprep.subr.mxu0 0.0
    %478 = vmatpush2.msra.mxu0 0.0
    %479 = vmatprep.subr.mxu0 0.0
    %480 = vmatpush2.msra.mxu0 0.0
    %481 = vmatprep.subr.mxu0 0.0
    %482 = vmatpush2.msra.mxu0 0.0
    %483 = vmatprep.mubr.f32.mxu0 0.0
    %484 = vmatmul.mubr.f32.gmra.mxu0 %v411
    %v485 = vpop.f32.mrf.mxu0
    %v486 = vpop.f32.mrf.mxu0
    %v487 = vadd.f32 0.0, %v486
    %488 = vmatprep.mubr.f32.mxu0 0.0
    %489 = vmatmul.mubr.f32.gmra.mxu0 %v412
    %v490 = vpop.f32.mrf.mxu0
    %v491 = vadd.f32 0.0, %v490
    %v492 = vpop.f32.mrf.mxu0
    %v493 = vadd.f32 0.0, %v492
    %494 = vmatprep.mubr.f32.mxu0 0.0
    %495 = vmatmul.mubr.f32.gmra.mxu0 %v413
    %v496 = vpop.f32.mrf.mxu0
    %v497 = vadd.f32 0.0, %v496
    %v498 = vpop.f32.mrf.mxu0
    %v499 = vadd.f32 0.0, %v498
    %500 = vmatprep.mubr.f32.mxu0 0.0
    %501 = vmatmul.mubr.f32.gmra.mxu0 %v414
    %v502 = vpop.f32.mrf.mxu0
    %v503 = vadd.f32 0.0, %v502
    %v504 = vpop.f32.mrf.mxu0
    %v505 = vadd.f32 0.0, %v504
    %506 = vmatprep.mubr.f32.mxu0 0.0
    %507 = vmatmul.mubr.f32.gmra.mxu0 %v415
    %v508 = vpop.f32.mrf.mxu0
    %v509 = vadd.f32 0.0, %v508
    %v510 = vpop.f32.mrf.mxu0
    %v511 = vadd.f32 0.0, %v510
    %512 = vmatprep.mubr.f32.mxu0 0.0
    %513 = vmatmul.mubr.f32.gmra.mxu0 %v416
    %v514 = vpop.f32.mrf.mxu0
    %v515 = vadd.f32 0.0, %v514
    %v516 = vpop.f32.mrf.mxu0
    %v517 = vadd.f32 0.0, %v516
    %518 = vmatprep.mubr.f32.mxu0 0.0
    %519 = vmatmul.mubr.f32.gmra.mxu0 %v417
    %v520 = vpop.f32.mrf.mxu0
    %v521 = vadd.f32 0.0, %v520
    %v522 = vpop.f32.mrf.mxu0
    %v523 = vadd.f32 0.0, %v522
    %524 = vmatprep.mubr.f32.mxu0 0.0
    %525 = vmatmul.mubr.f32.gmra.mxu0 %v418
    %v526 = vpop.f32.mrf.mxu0
    %v527 = vadd.f32 0.0, %v526
    %v528 = vpop.f32.mrf.mxu0
    %v529 = vadd.f32 0.0, %v528
    %530 = vdwg.mxu0
    %531 = vmatprep.subr.mxu0 0.0
    %532 = vmatpush1.msra.mxu0 %v104
    %533 = vmatprep.subr.mxu0 0.0
    %534 = vmatpush1.msra.mxu0 %v101
    %535 = vmatprep.subr.mxu0 0.0
    %536 = vmatpush1.msra.mxu0 %v98
    %537 = vmatprep.subr.mxu0 0.0
    %538 = vmatpush1.msra.mxu0 %v95
    %539 = vmatprep.subr.mxu0 0.0
    %540 = vmatpush1.msra.mxu0 %v92
    %541 = vmatprep.subr.mxu0 0.0
    %542 = vmatpush1.msra.mxu0 %v89
    %543 = vmatprep.subr.mxu0 0.0
    %544 = vmatpush1.msra.mxu0 %v86
    %545 = vmatprep.subr.mxu0 0.0
    %546 = vmatpush1.msra.mxu0 %v83
    %547 = vmatprep.subr.mxu0 0.0
    %548 = vmatpush1.msra.mxu0 %v80
    %549 = vmatprep.subr.mxu0 0.0
    %550 = vmatpush1.msra.mxu0 %v77
    %551 = vmatprep.subr.mxu0 0.0
    %552 = vmatpush1.msra.mxu0 %v74
    %553 = vmatprep.subr.mxu0 0.0
    %554 = vmatpush1.msra.mxu0 %v71
    %555 = vmatprep.subr.mxu0 0.0
    %556 = vmatpush1.msra.mxu0 %v68
    %557 = vmatprep.subr.mxu0 0.0
    %558 = vmatpush1.msra.mxu0 %v65
    %559 = vmatprep.subr.mxu0 0.0
    %560 = vmatpush1.msra.mxu0 %v62
    %561 = vmatprep.subr.mxu0 0.0
    %562 = vmatpush1.msra.mxu0 %v59
    %563 = vmatprep.subr.mxu0 0.0
    %564 = vmatpush2.msra.mxu0 0.0
    %565 = vmatprep.subr.mxu0 0.0
    %566 = vmatpush2.msra.mxu0 0.0
    %567 = vmatprep.subr.mxu0 0.0
    %568 = vmatpush2.msra.mxu0 0.0
    %569 = vmatprep.subr.mxu0 0.0
    %570 = vmatpush2.msra.mxu0 0.0
    %571 = vmatprep.subr.mxu0 0.0
    %572 = vmatpush2.msra.mxu0 0.0
    %573 = vmatprep.subr.mxu0 0.0
    %574 = vmatpush2.msra.mxu0 0.0
    %575 = vmatprep.subr.mxu0 0.0
    %576 = vmatpush2.msra.mxu0 0.0
    %577 = vmatprep.subr.mxu0 0.0
    %578 = vmatpush2.msra.mxu0 0.0
    %579 = vmatprep.subr.mxu0 0.0
    %580 = vmatpush2.msra.mxu0 0.0
    %581 = vmatprep.subr.mxu0 0.0
    %582 = vmatpush2.msra.mxu0 0.0
    %583 = vmatprep.subr.mxu0 0.0
    %584 = vmatpush2.msra.mxu0 0.0
    %585 = vmatprep.subr.mxu0 0.0
    %586 = vmatpush2.msra.mxu0 0.0
    %587 = vmatprep.subr.mxu0 0.0
    %588 = vmatpush2.msra.mxu0 0.0
    %589 = vmatprep.subr.mxu0 0.0
    %590 = vmatpush2.msra.mxu0 0.0
    %591 = vmatprep.subr.mxu0 0.0
    %592 = vmatpush2.msra.mxu0 0.0
    %593 = vmatprep.subr.mxu0 0.0
    %594 = vmatpush2.msra.mxu0 0.0
    %595 = vmatprep.mubr.f32.mxu0 0.0
    %596 = vmatmul.mubr.f32.gmra.mxu0 %v411
    %v597 = vpop.f32.mrf.mxu0
    %v598 = vadd.f32 0.0, %v597
    %v599 = vpop.f32.mrf.mxu0
    %600 = vmatprep.mubr.f32.mxu0 0.0
    %601 = vmatmul.mubr.f32.gmra.mxu0 %v412
    %v602 = vpop.f32.mrf.mxu0
    %v603 = vadd.f32 0.0, %v602
    %v604 = vpop.f32.mrf.mxu0
    %605 = vmatprep.mubr.f32.mxu0 0.0
    %606 = vmatmul.mubr.f32.gmra.mxu0 %v413
    %v607 = vpop.f32.mrf.mxu0
    %v608 = vadd.f32 0.0, %v607
    %v609 = vpop.f32.mrf.mxu0
    %610 = vmatprep.mubr.f32.mxu0 0.0
    %611 = vmatmul.mubr.f32.gmra.mxu0 %v414
    %v612 = vpop.f32.mrf.mxu0
    %v613 = vadd.f32 0.0, %v612
    %v614 = vpop.f32.mrf.mxu0
    %615 = vmatprep.mubr.f32.mxu0 0.0
    %616 = vmatmul.mubr.f32.gmra.mxu0 %v415
    %v617 = vpop.f32.mrf.mxu0
    %v618 = vadd.f32 0.0, %v617
    %v619 = vpop.f32.mrf.mxu0
    %620 = vmatprep.mubr.f32.mxu0 0.0
    %621 = vmatmul.mubr.f32.gmra.mxu0 %v416
    %v622 = vpop.f32.mrf.mxu0
    %v623 = vadd.f32 0.0, %v622
    %v624 = vpop.f32.mrf.mxu0
    %625 = vmatprep.mubr.f32.mxu0 0.0
    %626 = vmatmul.mubr.f32.gmra.mxu0 %v417
    %v627 = vpop.f32.mrf.mxu0
    %v628 = vadd.f32 0.0, %v627
    %v629 = vpop.f32.mrf.mxu0
    %630 = vmatprep.mubr.f32.mxu0 0.0
    %631 = vmatmul.mubr.f32.gmra.mxu0 %v418
    %v632 = vpop.f32.mrf.mxu0
    %v633 = vadd.f32 0.0, %v632
    %v634 = vpop.f32.mrf.mxu0
    %635 = vdwg.mxu0
    %v636 = vxor.u32 %v487, 2147483648
    %v637 = vmul.f32 %v636, 1.442695
    %v638 = vpow.pop %v637
    %v639 = vadd.f32 %v638, 1.0
    %v640 = vrcp.pop %v639
    %v641 = vmul.f32 1.0, %v640
    %v642 = vtanh.pop %v598
    %v643 = vsub.f32 1.0, %v641
    %v644 = vmul.f32 %v643, %v642
    %645 = vmatprep.subr.mxu0 %v151
    %646 = vmatpush1.msra.mxu0 %v150
    %647 = vmatprep.subr.mxu0 %v148
    %648 = vmatpush1.msra.mxu0 %v147
    %649 = vmatprep.subr.mxu0 %v145
    %650 = vmatpush1.msra.mxu0 %v144
    %651 = vmatprep.subr.mxu0 %v142
    %652 = vmatpush1.msra.mxu0 %v141
    %653 = vmatprep.subr.mxu0 %v139
    %654 = vmatpush1.msra.mxu0 %v138
    %655 = vmatprep.subr.mxu0 %v136
    %656 = vmatpush1.msra.mxu0 %v135
    %657 = vmatprep.subr.mxu0 %v133
    %658 = vmatpush1.msra.mxu0 %v132
    %659 = vmatprep.subr.mxu0 %v130
    %660 = vmatpush1.msra.mxu0 %v129
    %661 = vmatprep.subr.mxu0 %v127
    %662 = vmatpush1.msra.mxu0 %v126
    %663 = vmatprep.subr.mxu0 %v124
    %664 = vmatpush1.msra.mxu0 %v123
    %665 = vmatprep.subr.mxu0 %v121
    %666 = vmatpush1.msra.mxu0 %v120
    %667 = vmatprep.subr.mxu0 %v118
    %668 = vmatpush1.msra.mxu0 %v117
    %669 = vmatprep.subr.mxu0 %v115
    %670 = vmatpush1.msra.mxu0 %v114
    %671 = vmatprep.subr.mxu0 %v112
    %672 = vmatpush1.msra.mxu0 %v111
    %673 = vmatprep.subr.mxu0 %v109
    %674 = vmatpush1.msra.mxu0 %v108
    %675 = vmatprep.subr.mxu0 %v106
    %676 = vmatpush1.msra.mxu0 %v105
    %677 = vmatprep.subr.mxu0 0.0
    %678 = vmatpush2.msra.mxu0 0.0
    %679 = vmatprep.subr.mxu0 0.0
    %680 = vmatpush2.msra.mxu0 0.0
    %681 = vmatprep.subr.mxu0 0.0
    %682 = vmatpush2.msra.mxu0 0.0
    %683 = vmatprep.subr.mxu0 0.0
    %684 = vmatpush2.msra.mxu0 0.0
    %685 = vmatprep.subr.mxu0 0.0
    %686 = vmatpush2.msra.mxu0 0.0
    %687 = vmatprep.subr.mxu0 0.0
    %688 = vmatpush2.msra.mxu0 0.0
    %689 = vmatprep.subr.mxu0 0.0
    %690 = vmatpush2.msra.mxu0 0.0
    %691 = vmatprep.subr.mxu0 0.0
    %692 = vmatpush2.msra.mxu0 0.0
    %693 = vmatprep.subr.mxu0 0.0
    %694 = vmatpush2.msra.mxu0 0.0
    %695 = vmatprep.subr.mxu0 0.0
    %696 = vmatpush2.msra.mxu0 0.0
    %697 = vmatprep.subr.mxu0 0.0
    %698 = vmatpush2.msra.mxu0 0.0
    %699 = vmatprep.subr.mxu0 0.0
    %700 = vmatpush2.msra.mxu0 0.0
    %701 = vmatprep.subr.mxu0 0.0
    %702 = vmatpush2.msra.mxu0 0.0
    %703 = vmatprep.subr.mxu0 0.0
    %704 = vmatpush2.msra.mxu0 0.0
    %705 = vmatprep.subr.mxu0 0.0
    %706 = vmatpush2.msra.mxu0 0.0
    %707 = vmatprep.subr.mxu0 0.0
    %708 = vmatpush2.msra.mxu0 0.0
    %709 = vmatprep.mubr.f32.mxu0 0.0
    %710 = vmatmul.mubr.f32.gmra.mxu0 %v644
    %v711 = vpop.f32.mrf.mxu0
    %v712 = vadd.f32 0.0, %v711
    %v713 = vpop.f32.mrf.mxu0
    %v714 = vadd.f32 0.0, %v713
    %715 = vdwg.mxu0
    %716 = vmatprep.subr.mxu0 0.0
    %717 = vmatpush1.msra.mxu0 %v152
    %718 = vmatprep.subr.mxu0 0.0
    %719 = vmatpush1.msra.mxu0 %v149
    %720 = vmatprep.subr.mxu0 0.0
    %721 = vmatpush1.msra.mxu0 %v146
    %722 = vmatprep.subr.mxu0 0.0
    %723 = vmatpush1.msra.mxu0 %v143
    %724 = vmatprep.subr.mxu0 0.0
    %725 = vmatpush1.msra.mxu0 %v140
    %726 = vmatprep.subr.mxu0 0.0
    %727 = vmatpush1.msra.mxu0 %v137
    %728 = vmatprep.subr.mxu0 0.0
    %729 = vmatpush1.msra.mxu0 %v134
    %730 = vmatprep.subr.mxu0 0.0
    %731 = vmatpush1.msra.mxu0 %v131
    %732 = vmatprep.subr.mxu0 0.0
    %733 = vmatpush1.msra.mxu0 %v128
    %734 = vmatprep.subr.mxu0 0.0
    %735 = vmatpush1.msra.mxu0 %v125
    %736 = vmatprep.subr.mxu0 0.0
    %737 = vmatpush1.msra.mxu0 %v122
    %738 = vmatprep.subr.mxu0 0.0
    %739 = vmatpush1.msra.mxu0 %v119
    %740 = vmatprep.subr.mxu0 0.0
    %741 = vmatpush1.msra.mxu0 %v116
    %742 = vmatprep.subr.mxu0 0.0
    %743 = vmatpush1.msra.mxu0 %v113
    %744 = vmatprep.subr.mxu0 0.0
    %745 = vmatpush1.msra.mxu0 %v110
    %746 = vmatprep.subr.mxu0 0.0
    %747 = vmatpush1.msra.mxu0 %v107
    %748 = vmatprep.subr.mxu0 0.0
    %749 = vmatpush2.msra.mxu0 0.0
    %750 = vmatprep.subr.mxu0 0.0
    %751 = vmatpush2.msra.mxu0 0.0
    %752 = vmatprep.subr.mxu0 0.0
    %753 = vmatpush2.msra.mxu0 0.0
    %754 = vmatprep.subr.mxu0 0.0
    %755 = vmatpush2.msra.mxu0 0.0
    %756 = vmatprep.subr.mxu0 0.0
    %757 = vmatpush2.msra.mxu0 0.0
    %758 = vmatprep.subr.mxu0 0.0
    %759 = vmatpush2.msra.mxu0 0.0
    %760 = vmatprep.subr.mxu0 0.0
    %761 = vmatpush2.msra.mxu0 0.0
    %762 = vmatprep.subr.mxu0 0.0
    %763 = vmatpush2.msra.mxu0 0.0
    %764 = vmatprep.subr.mxu0 0.0
    %765 = vmatpush2.msra.mxu0 0.0
    %766 = vmatprep.subr.mxu0 0.0
    %767 = vmatpush2.msra.mxu0 0.0
    %768 = vmatprep.subr.mxu0 0.0
    %769 = vmatpush2.msra.mxu0 0.0
    %770 = vmatprep.subr.mxu0 0.0
    %771 = vmatpush2.msra.mxu0 0.0
    %772 = vmatprep.subr.mxu0 0.0
    %773 = vmatpush2.msra.mxu0 0.0
    %774 = vmatprep.subr.mxu0 0.0
    %775 = vmatpush2.msra.mxu0 0.0
    %776 = vmatprep.subr.mxu0 0.0
    %777 = vmatpush2.msra.mxu0 0.0
    %778 = vmatprep.subr.mxu0 0.0
    %779 = vmatpush2.msra.mxu0 0.0
    %780 = vmatprep.mubr.f32.mxu0 0.0
    %781 = vmatmul.mubr.f32.gmra.mxu0 %v644
    %v782 = vpop.f32.mrf.mxu0
    %v783 = vadd.f32 0.0, %v782
    %v784 = vpop.f32.mrf.mxu0
    %785 = vdwg.mxu0
    %v786 = vadd.f32 %v491, %v712
    %v787 = vxor.u32 %v786, 2147483648
    %v788 = vmul.f32 %v787, 1.442695
    %v789 = vpow.pop %v788
    %v790 = vadd.f32 %v789, 1.0
    %v791 = vrcp.pop %v790
    %v792 = vmul.f32 1.0, %v791
    %v793 = vadd.f32 %v493, %v714
    %v794 = vxor.u32 %v793, 2147483648
    %v795 = vmul.f32 %v794, 1.442695
    %v796 = vpow.pop %v795
    %v797 = vadd.f32 %v796, 1.0
    %v798 = vrcp.pop %v797
    %v799 = vmul.f32 1.0, %v798
    %v800 = vmul.f32 %v792, %v783
    %v801 = vadd.f32 %v603, %v800
    %v802 = vtanh.pop %v801
    %v803 = vsub.f32 1.0, %v799
    %v804 = vmul.f32 %v803, %v802
    %v805 = vmul.f32 %v799, %v644
    %v806 = vadd.f32 %v804, %v805
    %807 = vmatprep.subr.mxu0 %v151
    %808 = vmatpush1.msra.mxu0 %v150
    %809 = vmatprep.subr.mxu0 %v148
    %810 = vmatpush1.msra.mxu0 %v147
    %811 = vmatprep.subr.mxu0 %v145
    %812 = vmatpush1.msra.mxu0 %v144
    %813 = vmatprep.subr.mxu0 %v142
    %814 = vmatpush1.msra.mxu0 %v141
    %815 = vmatprep.subr.mxu0 %v139
    %816 = vmatpush1.msra.mxu0 %v138
    %817 = vmatprep.subr.mxu0 %v136
    %818 = vmatpush1.msra.mxu0 %v135
    %819 = vmatprep.subr.mxu0 %v133
    %820 = vmatpush1.msra.mxu0 %v132
    %821 = vmatprep.subr.mxu0 %v130
    %822 = vmatpush1.msra.mxu0 %v129
    %823 = vmatprep.subr.mxu0 %v127
    %824 = vmatpush1.msra.mxu0 %v126
    %825 = vmatprep.subr.mxu0 %v124
    %826 = vmatpush1.msra.mxu0 %v123
    %827 = vmatprep.subr.mxu0 %v121
    %828 = vmatpush1.msra.mxu0 %v120
    %829 = vmatprep.subr.mxu0 %v118
    %830 = vmatpush1.msra.mxu0 %v117
    %831 = vmatprep.subr.mxu0 %v115
    %832 = vmatpush1.msra.mxu0 %v114
    %833 = vmatprep.subr.mxu0 %v112
    %834 = vmatpush1.msra.mxu0 %v111
    %835 = vmatprep.subr.mxu0 %v109
    %836 = vmatpush1.msra.mxu0 %v108
    %837 = vmatprep.subr.mxu0 %v106
    %838 = vmatpush1.msra.mxu0 %v105
    %839 = vmatprep.subr.mxu0 0.0
    %840 = vmatpush2.msra.mxu0 0.0
    %841 = vmatprep.subr.mxu0 0.0
    %842 = vmatpush2.msra.mxu0 0.0
    %843 = vmatprep.subr.mxu0 0.0
    %844 = vmatpush2.msra.mxu0 0.0
    %845 = vmatprep.subr.mxu0 0.0
    %846 = vmatpush2.msra.mxu0 0.0
    %847 = vmatprep.subr.mxu0 0.0
    %848 = vmatpush2.msra.mxu0 0.0
    %849 = vmatprep.subr.mxu0 0.0
    %850 = vmatpush2.msra.mxu0 0.0
    %851 = vmatprep.subr.mxu0 0.0
    %852 = vmatpush2.msra.mxu0 0.0
    %853 = vmatprep.subr.mxu0 0.0
    %854 = vmatpush2.msra.mxu0 0.0
    %855 = vmatprep.subr.mxu0 0.0
    %856 = vmatpush2.msra.mxu0 0.0
    %857 = vmatprep.subr.mxu0 0.0
    %858 = vmatpush2.msra.mxu0 0.0
    %859 = vmatprep.subr.mxu0 0.0
    %860 = vmatpush2.msra.mxu0 0.0
    %861 = vmatprep.subr.mxu0 0.0
    %862 = vmatpush2.msra.mxu0 0.0
    %863 = vmatprep.subr.mxu0 0.0
    %864 = vmatpush2.msra.mxu0 0.0
    %865 = vmatprep.subr.mxu0 0.0
    %866 = vmatpush2.msra.mxu0 0.0
    %867 = vmatprep.subr.mxu0 0.0
    %868 = vmatpush2.msra.mxu0 0.0
    %869 = vmatprep.subr.mxu0 0.0
    %870 = vmatpush2.msra.mxu0 0.0
    %871 = vmatprep.mubr.f32.mxu0 0.0
    %872 = vmatmul.mubr.f32.gmra.mxu0 %v806
    %v873 = vpop.f32.mrf.mxu0
    %v874 = vadd.f32 0.0, %v873
    %v875 = vpop.f32.mrf.mxu0
    %v876 = vadd.f32 0.0, %v875
    %877 = vdwg.mxu0
    %878 = vmatprep.subr.mxu0 0.0
    %879 = vmatpush1.msra.mxu0 %v152
    %880 = vmatprep.subr.mxu0 0.0
    %881 = vmatpush1.msra.mxu0 %v149
    %882 = vmatprep.subr.mxu0 0.0
    %883 = vmatpush1.msra.mxu0 %v146
    %884 = vmatprep.subr.mxu0 0.0
    %885 = vmatpush1.msra.mxu0 %v143
    %886 = vmatprep.subr.mxu0 0.0
    %887 = vmatpush1.msra.mxu0 %v140
    %888 = vmatprep.subr.mxu0 0.0
    %889 = vmatpush1.msra.mxu0 %v137
    %890 = vmatprep.subr.mxu0 0.0
    %891 = vmatpush1.msra.mxu0 %v134
    %892 = vmatprep.subr.mxu0 0.0
    %893 = vmatpush1.msra.mxu0 %v131
    %894 = vmatprep.subr.mxu0 0.0
    %895 = vmatpush1.msra.mxu0 %v128
    %896 = vmatprep.subr.mxu0 0.0
    %897 = vmatpush1.msra.mxu0 %v125
    %898 = vmatprep.subr.mxu0 0.0
    %899 = vmatpush1.msra.mxu0 %v122
    %900 = vmatprep.subr.mxu0 0.0
    %901 = vmatpush1.msra.mxu0 %v119
    %902 = vmatprep.subr.mxu0 0.0
    %903 = vmatpush1.msra.mxu0 %v116
    %904 = vmatprep.subr.mxu0 0.0
    %905 = vmatpush1.msra.mxu0 %v113
    %906 = vmatprep.subr.mxu0 0.0
    %907 = vmatpush1.msra.mxu0 %v110
    %908 = vmatprep.subr.mxu0 0.0
    %909 = vmatpush1.msra.mxu0 %v107
    %910 = vmatprep.subr.mxu0 0.0
    %911 = vmatpush2.msra.mxu0 0.0
    %912 = vmatprep.subr.mxu0 0.0
    %913 = vmatpush2.msra.mxu0 0.0
    %914 = vmatprep.subr.mxu0 0.0
    %915 = vmatpush2.msra.mxu0 0.0
    %916 = vmatprep.subr.mxu0 0.0
    %917 = vmatpush2.msra.mxu0 0.0
    %918 = vmatprep.subr.mxu0 0.0
    %919 = vmatpush2.msra.mxu0 0.0
    %920 = vmatprep.subr.mxu0 0.0
    %921 = vmatpush2.msra.mxu0 0.0
    %922 = vmatprep.subr.mxu0 0.0
    %923 = vmatpush2.msra.mxu0 0.0
    %924 = vmatprep.subr.mxu0 0.0
    %925 = vmatpush2.msra.mxu0 0.0
    %926 = vmatprep.subr.mxu0 0.0
    %927 = vmatpush2.msra.mxu0 0.0
    %928 = vmatprep.subr.mxu0 0.0
    %929 = vmatpush2.msra.mxu0 0.0
    %930 = vmatprep.subr.mxu0 0.0
    %931 = vmatpush2.msra.mxu0 0.0
    %932 = vmatprep.subr.mxu0 0.0
    %933 = vmatpush2.msra.mxu0 0.0
    %934 = vmatprep.subr.mxu0 0.0
    %935 = vmatpush2.msra.mxu0 0.0
    %936 = vmatprep.subr.mxu0 0.0
    %937 = vmatpush2.msra.mxu0 0.0
    %938 = vmatprep.subr.mxu0 0.0
    %939 = vmatpush2.msra.mxu0 0.0
    %940 = vmatprep.subr.mxu0 0.0
    %941 = vmatpush2.msra.mxu0 0.0
    %942 = vmatprep.mubr.f32.mxu0 0.0
    %943 = vmatmul.mubr.f32.gmra.mxu0 %v806
    %v944 = vpop.f32.mrf.mxu0
    %v945 = vadd.f32 0.0, %v944
    %v946 = vpop.f32.mrf.mxu0
    %947 = vdwg.mxu0
    %v948 = vadd.f32 %v497, %v874
    %v949 = vxor.u32 %v948, 2147483648
    %v950 = vmul.f32 %v949, 1.442695
    %v951 = vpow.pop %v950
    %v952 = vadd.f32 %v951, 1.0
    %v953 = vrcp.pop %v952
    %v954 = vmul.f32 1.0, %v953
    %v955 = vadd.f32 %v499, %v876
    %v956 = vxor.u32 %v955, 2147483648
    %v957 = vmul.f32 %v956, 1.442695
    %v958 = vpow.pop %v957
    %v959 = vadd.f32 %v958, 1.0
    %v960 = vrcp.pop %v959
    %v961 = vmul.f32 1.0, %v960
    %v962 = vmul.f32 %v954, %v945
    %v963 = vadd.f32 %v608, %v962
    %v964 = vtanh.pop %v963
    %v965 = vsub.f32 1.0, %v961
    %v966 = vmul.f32 %v965, %v964
    %v967 = vmul.f32 %v961, %v806
    %v968 = vadd.f32 %v966, %v967
    %969 = vmatprep.subr.mxu0 %v151
    %970 = vmatpush1.msra.mxu0 %v150
    %971 = vmatprep.subr.mxu0 %v148
    %972 = vmatpush1.msra.mxu0 %v147
    %973 = vmatprep.subr.mxu0 %v145
    %974 = vmatpush1.msra.mxu0 %v144
    %975 = vmatprep.subr.mxu0 %v142
    %976 = vmatpush1.msra.mxu0 %v141
    %977 = vmatprep.subr.mxu0 %v139
    %978 = vmatpush1.msra.mxu0 %v138
    %979 = vmatprep.subr.mxu0 %v136
    %980 = vmatpush1.msra.mxu0 %v135
    %981 = vmatprep.subr.mxu0 %v133
    %982 = vmatpush1.msra.mxu0 %v132
    %983 = vmatprep.subr.mxu0 %v130
    %984 = vmatpush1.msra.mxu0 %v129
    %985 = vmatprep.subr.mxu0 %v127
    %986 = vmatpush1.msra.mxu0 %v126
    %987 = vmatprep.subr.mxu0 %v124
    %988 = vmatpush1.msra.mxu0 %v123
    %989 = vmatprep.subr.mxu0 %v121
    %990 = vmatpush1.msra.mxu0 %v120
    %991 = vmatprep.subr.mxu0 %v118
    %992 = vmatpush1.msra.mxu0 %v117
    %993 = vmatprep.subr.mxu0 %v115
    %994 = vmatpush1.msra.mxu0 %v114
    %995 = vmatprep.subr.mxu0 %v112
    %996 = vmatpush1.msra.mxu0 %v111
    %997 = vmatprep.subr.mxu0 %v109
    %998 = vmatpush1.msra.mxu0 %v108
    %999 = vmatprep.subr.mxu0 %v106
    %1000 = vmatpush1.msra.mxu0 %v105
    %1001 = vmatprep.subr.mxu0 0.0
    %1002 = vmatpush2.msra.mxu0 0.0
    %1003 = vmatprep.subr.mxu0 0.0
    %1004 = vmatpush2.msra.mxu0 0.0
    %1005 = vmatprep.subr.mxu0 0.0
    %1006 = vmatpush2.msra.mxu0 0.0
    %1007 = vmatprep.subr.mxu0 0.0
    %1008 = vmatpush2.msra.mxu0 0.0
    %1009 = vmatprep.subr.mxu0 0.0
    %1010 = vmatpush2.msra.mxu0 0.0
    %1011 = vmatprep.subr.mxu0 0.0
    %1012 = vmatpush2.msra.mxu0 0.0
    %1013 = vmatprep.subr.mxu0 0.0
    %1014 = vmatpush2.msra.mxu0 0.0
    %1015 = vmatprep.subr.mxu0 0.0
    %1016 = vmatpush2.msra.mxu0 0.0
    %1017 = vmatprep.subr.mxu0 0.0
    %1018 = vmatpush2.msra.mxu0 0.0
    %1019 = vmatprep.subr.mxu0 0.0
    %1020 = vmatpush2.msra.mxu0 0.0
    %1021 = vmatprep.subr.mxu0 0.0
    %1022 = vmatpush2.msra.mxu0 0.0
    %1023 = vmatprep.subr.mxu0 0.0
    %1024 = vmatpush2.msra.mxu0 0.0
    %1025 = vmatprep.subr.mxu0 0.0
    %1026 = vmatpush2.msra.mxu0 0.0
    %1027 = vmatprep.subr.mxu0 0.0
    %1028 = vmatpush2.msra.mxu0 0.0
    %1029 = vmatprep.subr.mxu0 0.0
    %1030 = vmatpush2.msra.mxu0 0.0
    %1031 = vmatprep.subr.mxu0 0.0
    %1032 = vmatpush2.msra.mxu0 0.0
    %1033 = vmatprep.mubr.f32.mxu0 0.0
    %1034 = vmatmul.mubr.f32.gmra.mxu0 %v968
    %v1035 = vpop.f32.mrf.mxu0
    %v1036 = vadd.f32 0.0, %v1035
    %v1037 = vpop.f32.mrf.mxu0
    %v1038 = vadd.f32 0.0, %v1037
    %1039 = vdwg.mxu0
    %1040 = vmatprep.subr.mxu0 0.0
    %1041 = vmatpush1.msra.mxu0 %v152
    %1042 = vmatprep.subr.mxu0 0.0
    %1043 = vmatpush1.msra.mxu0 %v149
    %1044 = vmatprep.subr.mxu0 0.0
    %1045 = vmatpush1.msra.mxu0 %v146
    %1046 = vmatprep.subr.mxu0 0.0
    %1047 = vmatpush1.msra.mxu0 %v143
    %1048 = vmatprep.subr.mxu0 0.0
    %1049 = vmatpush1.msra.mxu0 %v140
    %1050 = vmatprep.subr.mxu0 0.0
    %1051 = vmatpush1.msra.mxu0 %v137
    %1052 = vmatprep.subr.mxu0 0.0
    %1053 = vmatpush1.msra.mxu0 %v134
    %1054 = vmatprep.subr.mxu0 0.0
    %1055 = vmatpush1.msra.mxu0 %v131
    %1056 = vmatprep.subr.mxu0 0.0
    %1057 = vmatpush1.msra.mxu0 %v128
    %1058 = vmatprep.subr.mxu0 0.0
    %1059 = vmatpush1.msra.mxu0 %v125
    %1060 = vmatprep.subr.mxu0 0.0
    %1061 = vmatpush1.msra.mxu0 %v122
    %1062 = vmatprep.subr.mxu0 0.0
    %1063 = vmatpush1.msra.mxu0 %v119
    %1064 = vmatprep.subr.mxu0 0.0
    %1065 = vmatpush1.msra.mxu0 %v116
    %1066 = vmatprep.subr.mxu0 0.0
    %1067 = vmatpush1.msra.mxu0 %v113
    %1068 = vmatprep.subr.mxu0 0.0
    %1069 = vmatpush1.msra.mxu0 %v110
    %1070 = vmatprep.subr.mxu0 0.0
    %1071 = vmatpush1.msra.mxu0 %v107
    %1072 = vmatprep.subr.mxu0 0.0
    %1073 = vmatpush2.msra.mxu0 0.0
    %1074 = vmatprep.subr.mxu0 0.0
    %1075 = vmatpush2.msra.mxu0 0.0
    %1076 = vmatprep.subr.mxu0 0.0
    %1077 = vmatpush2.msra.mxu0 0.0
    %1078 = vmatprep.subr.mxu0 0.0
    %1079 = vmatpush2.msra.mxu0 0.0
    %1080 = vmatprep.subr.mxu0 0.0
    %1081 = vmatpush2.msra.mxu0 0.0
    %1082 = vmatprep.subr.mxu0 0.0
    %1083 = vmatpush2.msra.mxu0 0.0
    %1084 = vmatprep.subr.mxu0 0.0
    %1085 = vmatpush2.msra.mxu0 0.0
    %1086 = vmatprep.subr.mxu0 0.0
    %1087 = vmatpush2.msra.mxu0 0.0
    %1088 = vmatprep.subr.mxu0 0.0
    %1089 = vmatpush2.msra.mxu0 0.0
    %1090 = vmatprep.subr.mxu0 0.0
    %1091 = vmatpush2.msra.mxu0 0.0
    %1092 = vmatprep.subr.mxu0 0.0
    %1093 = vmatpush2.msra.mxu0 0.0
    %1094 = vmatprep.subr.mxu0 0.0
    %1095 = vmatpush2.msra.mxu0 0.0
    %1096 = vmatprep.subr.mxu0 0.0
    %1097 = vmatpush2.msra.mxu0 0.0
    %1098 = vmatprep.subr.mxu0 0.0
    %1099 = vmatpush2.msra.mxu0 0.0
    %1100 = vmatprep.subr.mxu0 0.0
    %1101 = vmatpush2.msra.mxu0 0.0
    %1102 = vmatprep.subr.mxu0 0.0
    %1103 = vmatpush2.msra.mxu0 0.0
    %1104 = vmatprep.mubr.f32.mxu0 0.0
    %1105 = vmatmul.mubr.f32.gmra.mxu0 %v968
    %v1106 = vpop.f32.mrf.mxu0
    %v1107 = vadd.f32 0.0, %v1106
    %v1108 = vpop.f32.mrf.mxu0
    %1109 = vdwg.mxu0
    %v1110 = vadd.f32 %v503, %v1036
    %v1111 = vxor.u32 %v1110, 2147483648
    %v1112 = vmul.f32 %v1111, 1.442695
    %v1113 = vpow.pop %v1112
    %v1114 = vadd.f32 %v1113, 1.0
    %v1115 = vrcp.pop %v1114
    %v1116 = vmul.f32 1.0, %v1115
    %v1117 = vadd.f32 %v505, %v1038
    %v1118 = vxor.u32 %v1117, 2147483648
    %v1119 = vmul.f32 %v1118, 1.442695
    %v1120 = vpow.pop %v1119
    %v1121 = vadd.f32 %v1120, 1.0
    %v1122 = vrcp.pop %v1121
    %v1123 = vmul.f32 1.0, %v1122
    %v1124 = vmul.f32 %v1116, %v1107
    %v1125 = vadd.f32 %v613, %v1124
    %v1126 = vtanh.pop %v1125
    %v1127 = vsub.f32 1.0, %v1123
    %v1128 = vmul.f32 %v1127, %v1126
    %v1129 = vmul.f32 %v1123, %v968
    %v1130 = vadd.f32 %v1128, %v1129
    %1131 = vmatprep.subr.mxu0 %v151
    %1132 = vmatpush1.msra.mxu0 %v150
    %1133 = vmatprep.subr.mxu0 %v148
    %1134 = vmatpush1.msra.mxu0 %v147
    %1135 = vmatprep.subr.mxu0 %v145
    %1136 = vmatpush1.msra.mxu0 %v144
    %1137 = vmatprep.subr.mxu0 %v142
    %1138 = vmatpush1.msra.mxu0 %v141
    %1139 = vmatprep.subr.mxu0 %v139
    %1140 = vmatpush1.msra.mxu0 %v138
    %1141 = vmatprep.subr.mxu0 %v136
    %1142 = vmatpush1.msra.mxu0 %v135
    %1143 = vmatprep.subr.mxu0 %v133
    %1144 = vmatpush1.msra.mxu0 %v132
    %1145 = vmatprep.subr.mxu0 %v130
    %1146 = vmatpush1.msra.mxu0 %v129
    %1147 = vmatprep.subr.mxu0 %v127
    %1148 = vmatpush1.msra.mxu0 %v126
    %1149 = vmatprep.subr.mxu0 %v124
    %1150 = vmatpush1.msra.mxu0 %v123
    %1151 = vmatprep.subr.mxu0 %v121
    %1152 = vmatpush1.msra.mxu0 %v120
    %1153 = vmatprep.subr.mxu0 %v118
    %1154 = vmatpush1.msra.mxu0 %v117
    %1155 = vmatprep.subr.mxu0 %v115
    %1156 = vmatpush1.msra.mxu0 %v114
    %1157 = vmatprep.subr.mxu0 %v112
    %1158 = vmatpush1.msra.mxu0 %v111
    %1159 = vmatprep.subr.mxu0 %v109
    %1160 = vmatpush1.msra.mxu0 %v108
    %1161 = vmatprep.subr.mxu0 %v106
    %1162 = vmatpush1.msra.mxu0 %v105
    %1163 = vmatprep.subr.mxu0 0.0
    %1164 = vmatpush2.msra.mxu0 0.0
    %1165 = vmatprep.subr.mxu0 0.0
    %1166 = vmatpush2.msra.mxu0 0.0
    %1167 = vmatprep.subr.mxu0 0.0
    %1168 = vmatpush2.msra.mxu0 0.0
    %1169 = vmatprep.subr.mxu0 0.0
    %1170 = vmatpush2.msra.mxu0 0.0
    %1171 = vmatprep.subr.mxu0 0.0
    %1172 = vmatpush2.msra.mxu0 0.0
    %1173 = vmatprep.subr.mxu0 0.0
    %1174 = vmatpush2.msra.mxu0 0.0
    %1175 = vmatprep.subr.mxu0 0.0
    %1176 = vmatpush2.msra.mxu0 0.0
    %1177 = vmatprep.subr.mxu0 0.0
    %1178 = vmatpush2.msra.mxu0 0.0
    %1179 = vmatprep.subr.mxu0 0.0
    %1180 = vmatpush2.msra.mxu0 0.0
    %1181 = vmatprep.subr.mxu0 0.0
    %1182 = vmatpush2.msra.mxu0 0.0
    %1183 = vmatprep.subr.mxu0 0.0
    %1184 = vmatpush2.msra.mxu0 0.0
    %1185 = vmatprep.subr.mxu0 0.0
    %1186 = vmatpush2.msra.mxu0 0.0
    %1187 = vmatprep.subr.mxu0 0.0
    %1188 = vmatpush2.msra.mxu0 0.0
    %1189 = vmatprep.subr.mxu0 0.0
    %1190 = vmatpush2.msra.mxu0 0.0
    %1191 = vmatprep.subr.mxu0 0.0
    %1192 = vmatpush2.msra.mxu0 0.0
    %1193 = vmatprep.subr.mxu0 0.0
    %1194 = vmatpush2.msra.mxu0 0.0
    %1195 = vmatprep.mubr.f32.mxu0 0.0
    %1196 = vmatmul.mubr.f32.gmra.mxu0 %v1130
    %v1197 = vpop.f32.mrf.mxu0
    %v1198 = vadd.f32 0.0, %v1197
    %v1199 = vpop.f32.mrf.mxu0
    %v1200 = vadd.f32 0.0, %v1199
    %1201 = vdwg.mxu0
    %1202 = vmatprep.subr.mxu0 0.0
    %1203 = vmatpush1.msra.mxu0 %v152
    %1204 = vmatprep.subr.mxu0 0.0
    %1205 = vmatpush1.msra.mxu0 %v149
    %1206 = vmatprep.subr.mxu0 0.0
    %1207 = vmatpush1.msra.mxu0 %v146
    %1208 = vmatprep.subr.mxu0 0.0
    %1209 = vmatpush1.msra.mxu0 %v143
    %1210 = vmatprep.subr.mxu0 0.0
    %1211 = vmatpush1.msra.mxu0 %v140
    %1212 = vmatprep.subr.mxu0 0.0
    %1213 = vmatpush1.msra.mxu0 %v137
    %1214 = vmatprep.subr.mxu0 0.0
    %1215 = vmatpush1.msra.mxu0 %v134
    %1216 = vmatprep.subr.mxu0 0.0
    %1217 = vmatpush1.msra.mxu0 %v131
    %1218 = vmatprep.subr.mxu0 0.0
    %1219 = vmatpush1.msra.mxu0 %v128
    %1220 = vmatprep.subr.mxu0 0.0
    %1221 = vmatpush1.msra.mxu0 %v125
    %1222 = vmatprep.subr.mxu0 0.0
    %1223 = vmatpush1.msra.mxu0 %v122
    %1224 = vmatprep.subr.mxu0 0.0
    %1225 = vmatpush1.msra.mxu0 %v119
    %1226 = vmatprep.subr.mxu0 0.0
    %1227 = vmatpush1.msra.mxu0 %v116
    %1228 = vmatprep.subr.mxu0 0.0
    %1229 = vmatpush1.msra.mxu0 %v113
    %1230 = vmatprep.subr.mxu0 0.0
    %1231 = vmatpush1.msra.mxu0 %v110
    %1232 = vmatprep.subr.mxu0 0.0
    %1233 = vmatpush1.msra.mxu0 %v107
    %1234 = vmatprep.subr.mxu0 0.0
    %1235 = vmatpush2.msra.mxu0 0.0
    %1236 = vmatprep.subr.mxu0 0.0
    %1237 = vmatpush2.msra.mxu0 0.0
    %1238 = vmatprep.subr.mxu0 0.0
    %1239 = vmatpush2.msra.mxu0 0.0
    %1240 = vmatprep.subr.mxu0 0.0
    %1241 = vmatpush2.msra.mxu0 0.0
    %1242 = vmatprep.subr.mxu0 0.0
    %1243 = vmatpush2.msra.mxu0 0.0
    %1244 = vmatprep.subr.mxu0 0.0
    %1245 = vmatpush2.msra.mxu0 0.0
    %1246 = vmatprep.subr.mxu0 0.0
    %1247 = vmatpush2.msra.mxu0 0.0
    %1248 = vmatprep.subr.mxu0 0.0
    %1249 = vmatpush2.msra.mxu0 0.0
    %1250 = vmatprep.subr.mxu0 0.0
    %1251 = vmatpush2.msra.mxu0 0.0
    %1252 = vmatprep.subr.mxu0 0.0
    %1253 = vmatpush2.msra.mxu0 0.0
    %1254 = vmatprep.subr.mxu0 0.0
    %1255 = vmatpush2.msra.mxu0 0.0
    %1256 = vmatprep.subr.mxu0 0.0
    %1257 = vmatpush2.msra.mxu0 0.0
    %1258 = vmatprep.subr.mxu0 0.0
    %1259 = vmatpush2.msra.mxu0 0.0
    %1260 = vmatprep.subr.mxu0 0.0
    %1261 = vmatpush2.msra.mxu0 0.0
    %1262 = vmatprep.subr.mxu0 0.0
    %1263 = vmatpush2.msra.mxu0 0.0
    %1264 = vmatprep.subr.mxu0 0.0
    %1265 = vmatpush2.msra.mxu0 0.0
    %1266 = vmatprep.mubr.f32.mxu0 0.0
    %1267 = vmatmul.mubr.f32.gmra.mxu0 %v1130
    %v1268 = vpop.f32.mrf.mxu0
    %v1269 = vadd.f32 0.0, %v1268
    %v1270 = vpop.f32.mrf.mxu0
    %1271 = vdwg.mxu0
    %v1272 = vadd.f32 %v509, %v1198
    %v1273 = vxor.u32 %v1272, 2147483648
    %v1274 = vmul.f32 %v1273, 1.442695
    %v1275 = vpow.pop %v1274
    %v1276 = vadd.f32 %v1275, 1.0
    %v1277 = vrcp.pop %v1276
    %v1278 = vmul.f32 1.0, %v1277
    %v1279 = vadd.f32 %v511, %v1200
    %v1280 = vxor.u32 %v1279, 2147483648
    %v1281 = vmul.f32 %v1280, 1.442695
    %v1282 = vpow.pop %v1281
    %v1283 = vadd.f32 %v1282, 1.0
    %v1284 = vrcp.pop %v1283
    %v1285 = vmul.f32 1.0, %v1284
    %v1286 = vmul.f32 %v1278, %v1269
    %v1287 = vadd.f32 %v618, %v1286
    %v1288 = vtanh.pop %v1287
    %v1289 = vsub.f32 1.0, %v1285
    %v1290 = vmul.f32 %v1289, %v1288
    %v1291 = vmul.f32 %v1285, %v1130
    %v1292 = vadd.f32 %v1290, %v1291
    %1293 = vmatprep.subr.mxu0 %v151
    %1294 = vmatpush1.msra.mxu0 %v150
    %1295 = vmatprep.subr.mxu0 %v148
    %1296 = vmatpush1.msra.mxu0 %v147
    %1297 = vmatprep.subr.mxu0 %v145
    %1298 = vmatpush1.msra.mxu0 %v144
    %1299 = vmatprep.subr.mxu0 %v142
    %1300 = vmatpush1.msra.mxu0 %v141
    %1301 = vmatprep.subr.mxu0 %v139
    %1302 = vmatpush1.msra.mxu0 %v138
    %1303 = vmatprep.subr.mxu0 %v136
    %1304 = vmatpush1.msra.mxu0 %v135
    %1305 = vmatprep.subr.mxu0 %v133
    %1306 = vmatpush1.msra.mxu0 %v132
    %1307 = vmatprep.subr.mxu0 %v130
    %1308 = vmatpush1.msra.mxu0 %v129
    %1309 = vmatprep.subr.mxu0 %v127
    %1310 = vmatpush1.msra.mxu0 %v126
    %1311 = vmatprep.subr.mxu0 %v124
    %1312 = vmatpush1.msra.mxu0 %v123
    %1313 = vmatprep.subr.mxu0 %v121
    %1314 = vmatpush1.msra.mxu0 %v120
    %1315 = vmatprep.subr.mxu0 %v118
    %1316 = vmatpush1.msra.mxu0 %v117
    %1317 = vmatprep.subr.mxu0 %v115
    %1318 = vmatpush1.msra.mxu0 %v114
    %1319 = vmatprep.subr.mxu0 %v112
    %1320 = vmatpush1.msra.mxu0 %v111
    %1321 = vmatprep.subr.mxu0 %v109
    %1322 = vmatpush1.msra.mxu0 %v108
    %1323 = vmatprep.subr.mxu0 %v106
    %1324 = vmatpush1.msra.mxu0 %v105
    %1325 = vmatprep.subr.mxu0 0.0
    %1326 = vmatpush2.msra.mxu0 0.0
    %1327 = vmatprep.subr.mxu0 0.0
    %1328 = vmatpush2.msra.mxu0 0.0
    %1329 = vmatprep.subr.mxu0 0.0
    %1330 = vmatpush2.msra.mxu0 0.0
    %1331 = vmatprep.subr.mxu0 0.0
    %1332 = vmatpush2.msra.mxu0 0.0
    %1333 = vmatprep.subr.mxu0 0.0
    %1334 = vmatpush2.msra.mxu0 0.0
    %1335 = vmatprep.subr.mxu0 0.0
    %1336 = vmatpush2.msra.mxu0 0.0
    %1337 = vmatprep.subr.mxu0 0.0
    %1338 = vmatpush2.msra.mxu0 0.0
    %1339 = vmatprep.subr.mxu0 0.0
    %1340 = vmatpush2.msra.mxu0 0.0
    %1341 = vmatprep.subr.mxu0 0.0
    %1342 = vmatpush2.msra.mxu0 0.0
    %1343 = vmatprep.subr.mxu0 0.0
    %1344 = vmatpush2.msra.mxu0 0.0
    %1345 = vmatprep.subr.mxu0 0.0
    %1346 = vmatpush2.msra.mxu0 0.0
    %1347 = vmatprep.subr.mxu0 0.0
    %1348 = vmatpush2.msra.mxu0 0.0
    %1349 = vmatprep.subr.mxu0 0.0
    %1350 = vmatpush2.msra.mxu0 0.0
    %1351 = vmatprep.subr.mxu0 0.0
    %1352 = vmatpush2.msra.mxu0 0.0
    %1353 = vmatprep.subr.mxu0 0.0
    %1354 = vmatpush2.msra.mxu0 0.0
    %1355 = vmatprep.subr.mxu0 0.0
    %1356 = vmatpush2.msra.mxu0 0.0
    %1357 = vmatprep.mubr.f32.mxu0 0.0
    %1358 = vmatmul.mubr.f32.gmra.mxu0 %v1292
    %v1359 = vpop.f32.mrf.mxu0
    %v1360 = vadd.f32 0.0, %v1359
    %v1361 = vpop.f32.mrf.mxu0
    %v1362 = vadd.f32 0.0, %v1361
    %1363 = vdwg.mxu0
    %1364 = vmatprep.subr.mxu0 0.0
    %1365 = vmatpush1.msra.mxu0 %v152
    %1366 = vmatprep.subr.mxu0 0.0
    %1367 = vmatpush1.msra.mxu0 %v149
    %1368 = vmatprep.subr.mxu0 0.0
    %1369 = vmatpush1.msra.mxu0 %v146
    %1370 = vmatprep.subr.mxu0 0.0
    %1371 = vmatpush1.msra.mxu0 %v143
    %1372 = vmatprep.subr.mxu0 0.0
    %1373 = vmatpush1.msra.mxu0 %v140
    %1374 = vmatprep.subr.mxu0 0.0
    %1375 = vmatpush1.msra.mxu0 %v137
    %1376 = vmatprep.subr.mxu0 0.0
    %1377 = vmatpush1.msra.mxu0 %v134
    %1378 = vmatprep.subr.mxu0 0.0
    %1379 = vmatpush1.msra.mxu0 %v131
    %1380 = vmatprep.subr.mxu0 0.0
    %1381 = vmatpush1.msra.mxu0 %v128
    %1382 = vmatprep.subr.mxu0 0.0
    %1383 = vmatpush1.msra.mxu0 %v125
    %1384 = vmatprep.subr.mxu0 0.0
    %1385 = vmatpush1.msra.mxu0 %v122
    %1386 = vmatprep.subr.mxu0 0.0
    %1387 = vmatpush1.msra.mxu0 %v119
    %1388 = vmatprep.subr.mxu0 0.0
    %1389 = vmatpush1.msra.mxu0 %v116
    %1390 = vmatprep.subr.mxu0 0.0
    %1391 = vmatpush1.msra.mxu0 %v113
    %1392 = vmatprep.subr.mxu0 0.0
    %1393 = vmatpush1.msra.mxu0 %v110
    %1394 = vmatprep.subr.mxu0 0.0
    %1395 = vmatpush1.msra.mxu0 %v107
    %1396 = vmatprep.subr.mxu0 0.0
    %1397 = vmatpush2.msra.mxu0 0.0
    %1398 = vmatprep.subr.mxu0 0.0
    %1399 = vmatpush2.msra.mxu0 0.0
    %1400 = vmatprep.subr.mxu0 0.0
    %1401 = vmatpush2.msra.mxu0 0.0
    %1402 = vmatprep.subr.mxu0 0.0
    %1403 = vmatpush2.msra.mxu0 0.0
    %1404 = vmatprep.subr.mxu0 0.0
    %1405 = vmatpush2.msra.mxu0 0.0
    %1406 = vmatprep.subr.mxu0 0.0
    %1407 = vmatpush2.msra.mxu0 0.0
    %1408 = vmatprep.subr.mxu0 0.0
    %1409 = vmatpush2.msra.mxu0 0.0
    %1410 = vmatprep.subr.mxu0 0.0
    %1411 = vmatpush2.msra.mxu0 0.0
    %1412 = vmatprep.subr.mxu0 0.0
    %1413 = vmatpush2.msra.mxu0 0.0
    %1414 = vmatprep.subr.mxu0 0.0
    %1415 = vmatpush2.msra.mxu0 0.0
    %1416 = vmatprep.subr.mxu0 0.0
    %1417 = vmatpush2.msra.mxu0 0.0
    %1418 = vmatprep.subr.mxu0 0.0
    %1419 = vmatpush2.msra.mxu0 0.0
    %1420 = vmatprep.subr.mxu0 0.0
    %1421 = vmatpush2.msra.mxu0 0.0
    %1422 = vmatprep.subr.mxu0 0.0
    %1423 = vmatpush2.msra.mxu0 0.0
    %1424 = vmatprep.subr.mxu0 0.0
    %1425 = vmatpush2.msra.mxu0 0.0
    %1426 = vmatprep.subr.mxu0 0.0
    %1427 = vmatpush2.msra.mxu0 0.0
    %1428 = vmatprep.mubr.f32.mxu0 0.0
    %1429 = vmatmul.mubr.f32.gmra.mxu0 %v1292
    %v1430 = vpop.f32.mrf.mxu0
    %v1431 = vadd.f32 0.0, %v1430
    %v1432 = vpop.f32.mrf.mxu0
    %1433 = vdwg.mxu0
    %v1434 = vadd.f32 %v515, %v1360
    %v1435 = vxor.u32 %v1434, 2147483648
    %v1436 = vmul.f32 %v1435, 1.442695
    %v1437 = vpow.pop %v1436
    %v1438 = vadd.f32 %v1437, 1.0
    %v1439 = vrcp.pop %v1438
    %v1440 = vmul.f32 1.0, %v1439
    %v1441 = vadd.f32 %v517, %v1362
    %v1442 = vxor.u32 %v1441, 2147483648
    %v1443 = vmul.f32 %v1442, 1.442695
    %v1444 = vpow.pop %v1443
    %v1445 = vadd.f32 %v1444, 1.0
    %v1446 = vrcp.pop %v1445
    %v1447 = vmul.f32 1.0, %v1446
    %v1448 = vmul.f32 %v1440, %v1431
    %v1449 = vadd.f32 %v623, %v1448
    %v1450 = vtanh.pop %v1449
    %v1451 = vsub.f32 1.0, %v1447
    %v1452 = vmul.f32 %v1451, %v1450
    %v1453 = vmul.f32 %v1447, %v1292
    %v1454 = vadd.f32 %v1452, %v1453
    %1455 = vmatprep.subr.mxu0 %v151
    %1456 = vmatpush1.msra.mxu0 %v150
    %1457 = vmatprep.subr.mxu0 %v148
    %1458 = vmatpush1.msra.mxu0 %v147
    %1459 = vmatprep.subr.mxu0 %v145
    %1460 = vmatpush1.msra.mxu0 %v144
    %1461 = vmatprep.subr.mxu0 %v142
    %1462 = vmatpush1.msra.mxu0 %v141
    %1463 = vmatprep.subr.mxu0 %v139
    %1464 = vmatpush1.msra.mxu0 %v138
    %1465 = vmatprep.subr.mxu0 %v136
    %1466 = vmatpush1.msra.mxu0 %v135
    %1467 = vmatprep.subr.mxu0 %v133
    %1468 = vmatpush1.msra.mxu0 %v132
    %1469 = vmatprep.subr.mxu0 %v130
    %1470 = vmatpush1.msra.mxu0 %v129
    %1471 = vmatprep.subr.mxu0 %v127
    %1472 = vmatpush1.msra.mxu0 %v126
    %1473 = vmatprep.subr.mxu0 %v124
    %1474 = vmatpush1.msra.mxu0 %v123
    %1475 = vmatprep.subr.mxu0 %v121
    %1476 = vmatpush1.msra.mxu0 %v120
    %1477 = vmatprep.subr.mxu0 %v118
    %1478 = vmatpush1.msra.mxu0 %v117
    %1479 = vmatprep.subr.mxu0 %v115
    %1480 = vmatpush1.msra.mxu0 %v114
    %1481 = vmatprep.subr.mxu0 %v112
    %1482 = vmatpush1.msra.mxu0 %v111
    %1483 = vmatprep.subr.mxu0 %v109
    %1484 = vmatpush1.msra.mxu0 %v108
    %1485 = vmatprep.subr.mxu0 %v106
    %1486 = vmatpush1.msra.mxu0 %v105
    %1487 = vmatprep.subr.mxu0 0.0
    %1488 = vmatpush2.msra.mxu0 0.0
    %1489 = vmatprep.subr.mxu0 0.0
    %1490 = vmatpush2.msra.mxu0 0.0
    %1491 = vmatprep.subr.mxu0 0.0
    %1492 = vmatpush2.msra.mxu0 0.0
    %1493 = vmatprep.subr.mxu0 0.0
    %1494 = vmatpush2.msra.mxu0 0.0
    %1495 = vmatprep.subr.mxu0 0.0
    %1496 = vmatpush2.msra.mxu0 0.0
    %1497 = vmatprep.subr.mxu0 0.0
    %1498 = vmatpush2.msra.mxu0 0.0
    %1499 = vmatprep.subr.mxu0 0.0
    %1500 = vmatpush2.msra.mxu0 0.0
    %1501 = vmatprep.subr.mxu0 0.0
    %1502 = vmatpush2.msra.mxu0 0.0
    %1503 = vmatprep.subr.mxu0 0.0
    %1504 = vmatpush2.msra.mxu0 0.0
    %1505 = vmatprep.subr.mxu0 0.0
    %1506 = vmatpush2.msra.mxu0 0.0
    %1507 = vmatprep.subr.mxu0 0.0
    %1508 = vmatpush2.msra.mxu0 0.0
    %1509 = vmatprep.subr.mxu0 0.0
    %1510 = vmatpush2.msra.mxu0 0.0
    %1511 = vmatprep.subr.mxu0 0.0
    %1512 = vmatpush2.msra.mxu0 0.0
    %1513 = vmatprep.subr.mxu0 0.0
    %1514 = vmatpush2.msra.mxu0 0.0
    %1515 = vmatprep.subr.mxu0 0.0
    %1516 = vmatpush2.msra.mxu0 0.0
    %1517 = vmatprep.subr.mxu0 0.0
    %1518 = vmatpush2.msra.mxu0 0.0
    %1519 = vmatprep.mubr.f32.mxu0 0.0
    %1520 = vmatmul.mubr.f32.gmra.mxu0 %v1454
    %v1521 = vpop.f32.mrf.mxu0
    %v1522 = vadd.f32 0.0, %v1521
    %v1523 = vpop.f32.mrf.mxu0
    %v1524 = vadd.f32 0.0, %v1523
    %1525 = vdwg.mxu0
    %1526 = vmatprep.subr.mxu0 0.0
    %1527 = vmatpush1.msra.mxu0 %v152
    %1528 = vmatprep.subr.mxu0 0.0
    %1529 = vmatpush1.msra.mxu0 %v149
    %1530 = vmatprep.subr.mxu0 0.0
    %1531 = vmatpush1.msra.mxu0 %v146
    %1532 = vmatprep.subr.mxu0 0.0
    %1533 = vmatpush1.msra.mxu0 %v143
    %1534 = vmatprep.subr.mxu0 0.0
    %1535 = vmatpush1.msra.mxu0 %v140
    %1536 = vmatprep.subr.mxu0 0.0
    %1537 = vmatpush1.msra.mxu0 %v137
    %1538 = vmatprep.subr.mxu0 0.0
    %1539 = vmatpush1.msra.mxu0 %v134
    %1540 = vmatprep.subr.mxu0 0.0
    %1541 = vmatpush1.msra.mxu0 %v131
    %1542 = vmatprep.subr.mxu0 0.0
    %1543 = vmatpush1.msra.mxu0 %v128
    %1544 = vmatprep.subr.mxu0 0.0
    %1545 = vmatpush1.msra.mxu0 %v125
    %1546 = vmatprep.subr.mxu0 0.0
    %1547 = vmatpush1.msra.mxu0 %v122
    %1548 = vmatprep.subr.mxu0 0.0
    %1549 = vmatpush1.msra.mxu0 %v119
    %1550 = vmatprep.subr.mxu0 0.0
    %1551 = vmatpush1.msra.mxu0 %v116
    %1552 = vmatprep.subr.mxu0 0.0
    %1553 = vmatpush1.msra.mxu0 %v113
    %1554 = vmatprep.subr.mxu0 0.0
    %1555 = vmatpush1.msra.mxu0 %v110
    %1556 = vmatprep.subr.mxu0 0.0
    %1557 = vmatpush1.msra.mxu0 %v107
    %1558 = vmatprep.subr.mxu0 0.0
    %1559 = vmatpush2.msra.mxu0 0.0
    %1560 = vmatprep.subr.mxu0 0.0
    %1561 = vmatpush2.msra.mxu0 0.0
    %1562 = vmatprep.subr.mxu0 0.0
    %1563 = vmatpush2.msra.mxu0 0.0
    %1564 = vmatprep.subr.mxu0 0.0
    %1565 = vmatpush2.msra.mxu0 0.0
    %1566 = vmatprep.subr.mxu0 0.0
    %1567 = vmatpush2.msra.mxu0 0.0
    %1568 = vmatprep.subr.mxu0 0.0
    %1569 = vmatpush2.msra.mxu0 0.0
    %1570 = vmatprep.subr.mxu0 0.0
    %1571 = vmatpush2.msra.mxu0 0.0
    %1572 = vmatprep.subr.mxu0 0.0
    %1573 = vmatpush2.msra.mxu0 0.0
    %1574 = vmatprep.subr.mxu0 0.0
    %1575 = vmatpush2.msra.mxu0 0.0
    %1576 = vmatprep.subr.mxu0 0.0
    %1577 = vmatpush2.msra.mxu0 0.0
    %1578 = vmatprep.subr.mxu0 0.0
    %1579 = vmatpush2.msra.mxu0 0.0
    %1580 = vmatprep.subr.mxu0 0.0
    %1581 = vmatpush2.msra.mxu0 0.0
    %1582 = vmatprep.subr.mxu0 0.0
    %1583 = vmatpush2.msra.mxu0 0.0
    %1584 = vmatprep.subr.mxu0 0.0
    %1585 = vmatpush2.msra.mxu0 0.0
    %1586 = vmatprep.subr.mxu0 0.0
    %1587 = vmatpush2.msra.mxu0 0.0
    %1588 = vmatprep.subr.mxu0 0.0
    %1589 = vmatpush2.msra.mxu0 0.0
    %1590 = vmatprep.mubr.f32.mxu0 0.0
    %1591 = vmatmul.mubr.f32.gmra.mxu0 %v1454
    %v1592 = vpop.f32.mrf.mxu0
    %v1593 = vadd.f32 0.0, %v1592
    %v1594 = vpop.f32.mrf.mxu0
    %1595 = vdwg.mxu0
    %v1596 = vadd.f32 %v521, %v1522
    %v1597 = vxor.u32 %v1596, 2147483648
    %v1598 = vmul.f32 %v1597, 1.442695
    %v1599 = vpow.pop %v1598
    %v1600 = vadd.f32 %v1599, 1.0
    %v1601 = vrcp.pop %v1600
    %v1602 = vmul.f32 1.0, %v1601
    %v1603 = vadd.f32 %v523, %v1524
    %v1604 = vxor.u32 %v1603, 2147483648
    %v1605 = vmul.f32 %v1604, 1.442695
    %v1606 = vpow.pop %v1605
    %v1607 = vadd.f32 %v1606, 1.0
    %v1608 = vrcp.pop %v1607
    %v1609 = vmul.f32 1.0, %v1608
    %v1610 = vmul.f32 %v1602, %v1593
    %v1611 = vadd.f32 %v628, %v1610
    %v1612 = vtanh.pop %v1611
    %v1613 = vsub.f32 1.0, %v1609
    %v1614 = vmul.f32 %v1613, %v1612
    %v1615 = vmul.f32 %v1609, %v1454
    %v1616 = vadd.f32 %v1614, %v1615
    %1617 = vmatprep.subr.mxu0 %v151
    %1618 = vmatpush1.msra.mxu0 %v150
    %1619 = vmatprep.subr.mxu0 %v148
    %1620 = vmatpush1.msra.mxu0 %v147
    %1621 = vmatprep.subr.mxu0 %v145
    %1622 = vmatpush1.msra.mxu0 %v144
    %1623 = vmatprep.subr.mxu0 %v142
    %1624 = vmatpush1.msra.mxu0 %v141
    %1625 = vmatprep.subr.mxu0 %v139
    %1626 = vmatpush1.msra.mxu0 %v138
    %1627 = vmatprep.subr.mxu0 %v136
    %1628 = vmatpush1.msra.mxu0 %v135
    %1629 = vmatprep.subr.mxu0 %v133
    %1630 = vmatpush1.msra.mxu0 %v132
    %1631 = vmatprep.subr.mxu0 %v130
    %1632 = vmatpush1.msra.mxu0 %v129
    %1633 = vmatprep.subr.mxu0 %v127
    %1634 = vmatpush1.msra.mxu0 %v126
    %1635 = vmatprep.subr.mxu0 %v124
    %1636 = vmatpush1.msra.mxu0 %v123
    %1637 = vmatprep.subr.mxu0 %v121
    %1638 = vmatpush1.msra.mxu0 %v120
    %1639 = vmatprep.subr.mxu0 %v118
    %1640 = vmatpush1.msra.mxu0 %v117
    %1641 = vmatprep.subr.mxu0 %v115
    %1642 = vmatpush1.msra.mxu0 %v114
    %1643 = vmatprep.subr.mxu0 %v112
    %1644 = vmatpush1.msra.mxu0 %v111
    %1645 = vmatprep.subr.mxu0 %v109
    %1646 = vmatpush1.msra.mxu0 %v108
    %1647 = vmatprep.subr.mxu0 %v106
    %1648 = vmatpush1.msra.mxu0 %v105
    %1649 = vmatprep.subr.mxu0 0.0
    %1650 = vmatpush2.msra.mxu0 0.0
    %1651 = vmatprep.subr.mxu0 0.0
    %1652 = vmatpush2.msra.mxu0 0.0
    %1653 = vmatprep.subr.mxu0 0.0
    %1654 = vmatpush2.msra.mxu0 0.0
    %1655 = vmatprep.subr.mxu0 0.0
    %1656 = vmatpush2.msra.mxu0 0.0
    %1657 = vmatprep.subr.mxu0 0.0
    %1658 = vmatpush2.msra.mxu0 0.0
    %1659 = vmatprep.subr.mxu0 0.0
    %1660 = vmatpush2.msra.mxu0 0.0
    %1661 = vmatprep.subr.mxu0 0.0
    %1662 = vmatpush2.msra.mxu0 0.0
    %1663 = vmatprep.subr.mxu0 0.0
    %1664 = vmatpush2.msra.mxu0 0.0
    %1665 = vmatprep.subr.mxu0 0.0
    %1666 = vmatpush2.msra.mxu0 0.0
    %1667 = vmatprep.subr.mxu0 0.0
    %1668 = vmatpush2.msra.mxu0 0.0
    %1669 = vmatprep.subr.mxu0 0.0
    %1670 = vmatpush2.msra.mxu0 0.0
    %1671 = vmatprep.subr.mxu0 0.0
    %1672 = vmatpush2.msra.mxu0 0.0
    %1673 = vmatprep.subr.mxu0 0.0
    %1674 = vmatpush2.msra.mxu0 0.0
    %1675 = vmatprep.subr.mxu0 0.0
    %1676 = vmatpush2.msra.mxu0 0.0
    %1677 = vmatprep.subr.mxu0 0.0
    %1678 = vmatpush2.msra.mxu0 0.0
    %1679 = vmatprep.subr.mxu0 0.0
    %1680 = vmatpush2.msra.mxu0 0.0
    %1681 = vmatprep.mubr.f32.mxu0 0.0
    %1682 = vmatmul.mubr.f32.gmra.mxu0 %v1616
    %v1683 = vpop.f32.mrf.mxu0
    %v1684 = vadd.f32 0.0, %v1683
    %v1685 = vpop.f32.mrf.mxu0
    %v1686 = vadd.f32 0.0, %v1685
    %1687 = vdwg.mxu0
    %1688 = vmatprep.subr.mxu0 0.0
    %1689 = vmatpush1.msra.mxu0 %v152
    %1690 = vmatprep.subr.mxu0 0.0
    %1691 = vmatpush1.msra.mxu0 %v149
    %1692 = vmatprep.subr.mxu0 0.0
    %1693 = vmatpush1.msra.mxu0 %v146
    %1694 = vmatprep.subr.mxu0 0.0
    %1695 = vmatpush1.msra.mxu0 %v143
    %1696 = vmatprep.subr.mxu0 0.0
    %1697 = vmatpush1.msra.mxu0 %v140
    %1698 = vmatprep.subr.mxu0 0.0
    %1699 = vmatpush1.msra.mxu0 %v137
    %1700 = vmatprep.subr.mxu0 0.0
    %1701 = vmatpush1.msra.mxu0 %v134
    %1702 = vmatprep.subr.mxu0 0.0
    %1703 = vmatpush1.msra.mxu0 %v131
    %1704 = vmatprep.subr.mxu0 0.0
    %1705 = vmatpush1.msra.mxu0 %v128
    %1706 = vmatprep.subr.mxu0 0.0
    %1707 = vmatpush1.msra.mxu0 %v125
    %1708 = vmatprep.subr.mxu0 0.0
    %1709 = vmatpush1.msra.mxu0 %v122
    %1710 = vmatprep.subr.mxu0 0.0
    %1711 = vmatpush1.msra.mxu0 %v119
    %1712 = vmatprep.subr.mxu0 0.0
    %1713 = vmatpush1.msra.mxu0 %v116
    %1714 = vmatprep.subr.mxu0 0.0
    %1715 = vmatpush1.msra.mxu0 %v113
    %1716 = vmatprep.subr.mxu0 0.0
    %1717 = vmatpush1.msra.mxu0 %v110
    %1718 = vmatprep.subr.mxu0 0.0
    %1719 = vmatpush1.msra.mxu0 %v107
    %1720 = vmatprep.subr.mxu0 0.0
    %1721 = vmatpush2.msra.mxu0 0.0
    %1722 = vmatprep.subr.mxu0 0.0
    %1723 = vmatpush2.msra.mxu0 0.0
    %1724 = vmatprep.subr.mxu0 0.0
    %1725 = vmatpush2.msra.mxu0 0.0
    %1726 = vmatprep.subr.mxu0 0.0
    %1727 = vmatpush2.msra.mxu0 0.0
    %1728 = vmatprep.subr.mxu0 0.0
    %1729 = vmatpush2.msra.mxu0 0.0
    %1730 = vmatprep.subr.mxu0 0.0
    %1731 = vmatpush2.msra.mxu0 0.0
    %1732 = vmatprep.subr.mxu0 0.0
    %1733 = vmatpush2.msra.mxu0 0.0
    %1734 = vmatprep.subr.mxu0 0.0
    %1735 = vmatpush2.msra.mxu0 0.0
    %1736 = vmatprep.subr.mxu0 0.0
    %1737 = vmatpush2.msra.mxu0 0.0
    %1738 = vmatprep.subr.mxu0 0.0
    %1739 = vmatpush2.msra.mxu0 0.0
    %1740 = vmatprep.subr.mxu0 0.0
    %1741 = vmatpush2.msra.mxu0 0.0
    %1742 = vmatprep.subr.mxu0 0.0
    %1743 = vmatpush2.msra.mxu0 0.0
    %1744 = vmatprep.subr.mxu0 0.0
    %1745 = vmatpush2.msra.mxu0 0.0
    %1746 = vmatprep.subr.mxu0 0.0
    %1747 = vmatpush2.msra.mxu0 0.0
    %1748 = vmatprep.subr.mxu0 0.0
    %1749 = vmatpush2.msra.mxu0 0.0
    %1750 = vmatprep.subr.mxu0 0.0
    %1751 = vmatpush2.msra.mxu0 0.0
    %1752 = vmatprep.mubr.f32.mxu0 0.0
    %1753 = vmatmul.mubr.f32.gmra.mxu0 %v1616
    %v1754 = vpop.f32.mrf.mxu0
    %v1755 = vadd.f32 0.0, %v1754
    %v1756 = vpop.f32.mrf.mxu0
    %1757 = vdwg.mxu0
    %v1758 = vadd.f32 %v527, %v1684
    %v1759 = vxor.u32 %v1758, 2147483648
    %v1760 = vmul.f32 %v1759, 1.442695
    %v1761 = vpow.pop %v1760
    %v1762 = vadd.f32 %v1761, 1.0
    %v1763 = vrcp.pop %v1762
    %v1764 = vmul.f32 1.0, %v1763
    %v1765 = vadd.f32 %v529, %v1686
    %v1766 = vxor.u32 %v1765, 2147483648
    %v1767 = vmul.f32 %v1766, 1.442695
    %v1768 = vpow.pop %v1767
    %v1769 = vadd.f32 %v1768, 1.0
    %v1770 = vrcp.pop %v1769
    %v1771 = vmul.f32 1.0, %v1770
    %v1772 = vmul.f32 %v1764, %v1755
    %v1773 = vadd.f32 %v633, %v1772
    %v1774 = vtanh.pop %v1773
    %v1775 = vsub.f32 1.0, %v1771
    %v1776 = vmul.f32 %v1775, %v1774
    %v1777 = vmul.f32 %v1771, %v1616
    %v1778 = vadd.f32 %v1776, %v1777
    %1779 = vmatprep.subr.mxu0 0.0
    %1780 = vmatpush1.msra.mxu0 %v168
    %1781 = vmatprep.subr.mxu0 0.0
    %1782 = vmatpush1.msra.mxu0 %v167
    %1783 = vmatprep.subr.mxu0 0.0
    %1784 = vmatpush1.msra.mxu0 %v166
    %1785 = vmatprep.subr.mxu0 0.0
    %1786 = vmatpush1.msra.mxu0 %v165
    %1787 = vmatprep.subr.mxu0 0.0
    %1788 = vmatpush1.msra.mxu0 %v164
    %1789 = vmatprep.subr.mxu0 0.0
    %1790 = vmatpush1.msra.mxu0 %v163
    %1791 = vmatprep.subr.mxu0 0.0
    %1792 = vmatpush1.msra.mxu0 %v162
    %1793 = vmatprep.subr.mxu0 0.0
    %1794 = vmatpush1.msra.mxu0 %v161
    %1795 = vmatprep.subr.mxu0 0.0
    %1796 = vmatpush1.msra.mxu0 %v160
    %1797 = vmatprep.subr.mxu0 0.0
    %1798 = vmatpush1.msra.mxu0 %v159
    %1799 = vmatprep.subr.mxu0 0.0
    %1800 = vmatpush1.msra.mxu0 %v158
    %1801 = vmatprep.subr.mxu0 0.0
    %1802 = vmatpush1.msra.mxu0 %v157
    %1803 = vmatprep.subr.mxu0 0.0
    %1804 = vmatpush1.msra.mxu0 %v156
    %1805 = vmatprep.subr.mxu0 0.0
    %1806 = vmatpush1.msra.mxu0 %v155
    %1807 = vmatprep.subr.mxu0 0.0
    %1808 = vmatpush1.msra.mxu0 %v154
    %1809 = vmatprep.subr.mxu0 0.0
    %1810 = vmatpush1.msra.mxu0 %v153
    %1811 = vmatprep.subr.mxu0 0.0
    %1812 = vmatpush2.msra.mxu0 0.0
    %1813 = vmatprep.subr.mxu0 0.0
    %1814 = vmatpush2.msra.mxu0 0.0
    %1815 = vmatprep.subr.mxu0 0.0
    %1816 = vmatpush2.msra.mxu0 0.0
    %1817 = vmatprep.subr.mxu0 0.0
    %1818 = vmatpush2.msra.mxu0 0.0
    %1819 = vmatprep.subr.mxu0 0.0
    %1820 = vmatpush2.msra.mxu0 0.0
    %1821 = vmatprep.subr.mxu0 0.0
    %1822 = vmatpush2.msra.mxu0 0.0
    %1823 = vmatprep.subr.mxu0 0.0
    %1824 = vmatpush2.msra.mxu0 0.0
    %1825 = vmatprep.subr.mxu0 0.0
    %1826 = vmatpush2.msra.mxu0 0.0
    %1827 = vmatprep.subr.mxu0 0.0
    %1828 = vmatpush2.msra.mxu0 0.0
    %1829 = vmatprep.subr.mxu0 0.0
    %1830 = vmatpush2.msra.mxu0 0.0
    %1831 = vmatprep.subr.mxu0 0.0
    %1832 = vmatpush2.msra.mxu0 0.0
    %1833 = vmatprep.subr.mxu0 0.0
    %1834 = vmatpush2.msra.mxu0 0.0
    %1835 = vmatprep.subr.mxu0 0.0
    %1836 = vmatpush2.msra.mxu0 0.0
    %1837 = vmatprep.subr.mxu0 0.0
    %1838 = vmatpush2.msra.mxu0 0.0
    %1839 = vmatprep.subr.mxu0 0.0
    %1840 = vmatpush2.msra.mxu0 0.0
    %1841 = vmatprep.subr.mxu0 0.0
    %1842 = vmatpush2.msra.mxu0 0.0
    %1843 = vmatprep.mubr.f32.mxu0 0.0
    %1844 = vmatmul.mubr.f32.gmra.mxu0 %v1778
    %v1845 = vpop.f32.mrf.mxu0
    %v1846 = vadd.f32 0.0, %v1845
    %v1847 = vpop.f32.mrf.mxu0
    %1848 = vdwg.mxu0
    %v1849 = vmax.f32 %v1846, 0.0
    %1850 = vmatprep.subr.mxu0 0.0
    %1851 = vmatpush1.msra.mxu0 %v184
    %1852 = vmatprep.subr.mxu0 0.0
    %1853 = vmatpush1.msra.mxu0 %v183
    %1854 = vmatprep.subr.mxu0 0.0
    %1855 = vmatpush1.msra.mxu0 %v182
    %1856 = vmatprep.subr.mxu0 0.0
    %1857 = vmatpush1.msra.mxu0 %v181
    %1858 = vmatprep.subr.mxu0 0.0
    %1859 = vmatpush1.msra.mxu0 %v180
    %1860 = vmatprep.subr.mxu0 0.0
    %1861 = vmatpush1.msra.mxu0 %v179
    %1862 = vmatprep.subr.mxu0 0.0
    %1863 = vmatpush1.msra.mxu0 %v178
    %1864 = vmatprep.subr.mxu0 0.0
    %1865 = vmatpush1.msra.mxu0 %v177
    %1866 = vmatprep.subr.mxu0 0.0
    %1867 = vmatpush1.msra.mxu0 %v176
    %1868 = vmatprep.subr.mxu0 0.0
    %1869 = vmatpush1.msra.mxu0 %v175
    %1870 = vmatprep.subr.mxu0 0.0
    %1871 = vmatpush1.msra.mxu0 %v174
    %1872 = vmatprep.subr.mxu0 0.0
    %1873 = vmatpush1.msra.mxu0 %v173
    %1874 = vmatprep.subr.mxu0 0.0
    %1875 = vmatpush1.msra.mxu0 %v172
    %1876 = vmatprep.subr.mxu0 0.0
    %1877 = vmatpush1.msra.mxu0 %v171
    %1878 = vmatprep.subr.mxu0 0.0
    %1879 = vmatpush1.msra.mxu0 %v170
    %1880 = vmatprep.subr.mxu0 0.0
    %1881 = vmatpush1.msra.mxu0 %v169
    %1882 = vmatprep.subr.mxu0 0.0
    %1883 = vmatpush2.msra.mxu0 0.0
    %1884 = vmatprep.subr.mxu0 0.0
    %1885 = vmatpush2.msra.mxu0 0.0
    %1886 = vmatprep.subr.mxu0 0.0
    %1887 = vmatpush2.msra.mxu0 0.0
    %1888 = vmatprep.subr.mxu0 0.0
    %1889 = vmatpush2.msra.mxu0 0.0
    %1890 = vmatprep.subr.mxu0 0.0
    %1891 = vmatpush2.msra.mxu0 0.0
    %1892 = vmatprep.subr.mxu0 0.0
    %1893 = vmatpush2.msra.mxu0 0.0
    %1894 = vmatprep.subr.mxu0 0.0
    %1895 = vmatpush2.msra.mxu0 0.0
    %1896 = vmatprep.subr.mxu0 0.0
    %1897 = vmatpush2.msra.mxu0 0.0
    %1898 = vmatprep.subr.mxu0 0.0
    %1899 = vmatpush2.msra.mxu0 0.0
    %1900 = vmatprep.subr.mxu0 0.0
    %1901 = vmatpush2.msra.mxu0 0.0
    %1902 = vmatprep.subr.mxu0 0.0
    %1903 = vmatpush2.msra.mxu0 0.0
    %1904 = vmatprep.subr.mxu0 0.0
    %1905 = vmatpush2.msra.mxu0 0.0
    %1906 = vmatprep.subr.mxu0 0.0
    %1907 = vmatpush2.msra.mxu0 0.0
    %1908 = vmatprep.subr.mxu0 0.0
    %1909 = vmatpush2.msra.mxu0 0.0
    %1910 = vmatprep.subr.mxu0 0.0
    %1911 = vmatpush2.msra.mxu0 0.0
    %1912 = vmatprep.subr.mxu0 0.0
    %1913 = vmatpush2.msra.mxu0 0.0
    %1914 = vmatprep.mubr.f32.mxu0 0.0
    %1915 = vmatmul.mubr.f32.gmra.mxu0 %v1849
    %v1916 = vpop.f32.mrf.mxu0
    %v1917 = vadd.f32 0.0, %v1916
    %v1918 = vpop.f32.mrf.mxu0
    %1919 = vdwg.mxu0
    %1920 = vst [vmem:[%s2] sm:$0xff] %v1917
    // Predicated region
    $region14: #{pretext_encoder_forward.1} parent=1 // pred_check
      _
    $region15: #{pretext_encoder_forward.1} parent=1 // pred_check_branch
      %1922 = sbr.rel (0) target = $region17
    $region16: #{pretext_encoder_forward.1} parent=1 // pred_region
      _
    $region17: #{pretext_encoder_forward.1} parent=1 // pred_fallthru
      _
    // Predicated region
    $region18: #{pretext_encoder_forward.1} parent=1 // pred_check
      _
    $region19: #{pretext_encoder_forward.1} parent=1 // pred_check_branch
      %1924 = sbr.rel (0) target = $region21
    $region20: #{pretext_encoder_forward.1} parent=1 // pred_region
      _
    $region21: #{pretext_encoder_forward.1} parent=1 // pred_fallthru
      _
    %1925 = vsyncpa [#allocation3], 1

</llo_original>
